<compile_context>
chip_gen: v6e
topology: v6e:2x2x1
jax: 0.10.0
libtpu: 0.0.40
codegen_flags: <defaults>
</compile_context>

<pallas_src>
import functools

import jax
import jax.numpy as jnp
from jax.experimental import pallas as pl
from jax.experimental.pallas import tpu as pltpu

EPS = 1e-5


def _round_up(x, m):
    return (x + m - 1) // m * m


# --------------------------------------------------------------------------
# Fused kernel: grid = (3 phases, T batch tiles), phases iterate outermost.
#   phase 0: encoders + Linear(Ddim+Pdim, H1) -> bf16 h1 scratch + stats
#   phase 1: BN1 + ReLU + Linear(H1, H2)      -> bf16 h2 scratch + stats
#   phase 2: BN2 + ReLU + Linear(H2, 1)       -> lane-dense (1, TM) output
# --------------------------------------------------------------------------
def _fused_kernel(dx_ref, px_ref, wd_ref, wp_ref, w1d_ref, w1p_ref, w2_ref,
                  vec1_ref, vec2_ref, vec3_ref,
                  out_ref,
                  h1_buf, h2_buf, st1_ref, st2_ref,
                  *, tm, batch, ddim, pdim, h1dim, h2dim, masked):
    p = pl.program_id(0)
    t = pl.program_id(1)
    row0 = pl.multiple_of(t * tm, tm)
    inv_b = 1.0 / batch

    def stats(x):
        # masked per-tile [sum; sumsq] of the (already bf16-rounded) values
        if masked:
            rows = jax.lax.broadcasted_iota(jnp.int32, x.shape, 0) + t * tm
            xm = jnp.where(rows < batch, x, 0.0)
        else:
            xm = x
        return jnp.concatenate(
            [jnp.sum(xm, axis=0, keepdims=True),
             jnp.sum(xm * x, axis=0, keepdims=True)], axis=0)

    # ---------------- phase 0: encoders + Linear(Ddim+Pdim, H1) -------------
    @pl.when(p == 0)
    def _():
        @pl.when(t == 0)
        def _():
            st1_ref[...] = jnp.zeros_like(st1_ref)
            st2_ref[...] = jnp.zeros_like(st2_ref)

        bd = vec1_ref[:, 0:ddim]
        bp = vec1_ref[:, ddim:ddim + pdim]
        b1 = vec1_ref[:, ddim + pdim:ddim + pdim + h1dim]

        dv = jnp.dot(dx_ref[...], wd_ref[...],
                     preferred_element_type=jnp.float32) + bd
        pv = jnp.dot(px_ref[...], wp_ref[...],
                     preferred_element_type=jnp.float32) + bp
        # concat([dv, pv]) @ W1 == dv @ W1[:Ddim] + pv @ W1[Ddim:]
        h1 = (jnp.dot(dv.astype(jnp.bfloat16), w1d_ref[...],
                      preferred_element_type=jnp.float32)
              + jnp.dot(pv.astype(jnp.bfloat16), w1p_ref[...],
                        preferred_element_type=jnp.float32)
              + b1)
        h1b = h1.astype(jnp.bfloat16)
        h1_buf[pl.ds(row0, tm), :] = h1b
        st1_ref[...] += stats(h1b.astype(jnp.float32))

    # ---------------- phase 1: BN1 + ReLU + Linear(H1, H2) ------------------
    @pl.when(p == 1)
    def _():
        gamma = vec2_ref[:, 0:h1dim]
        beta = vec2_ref[:, h1dim:2 * h1dim]
        b2 = vec2_ref[:, 2 * h1dim:2 * h1dim + h2dim]

        mean = st1_ref[0:1, :] * inv_b
        var = st1_ref[1:2, :] * inv_b - mean * mean
        scale = gamma * jax.lax.rsqrt(var + EPS)     # fused BN affine
        shift = beta - mean * scale

        h1f = h1_buf[pl.ds(row0, tm), :].astype(jnp.float32)
        a = jnp.maximum(h1f * scale + shift, 0.0)
        h2 = jnp.dot(a.astype(jnp.bfloat16), w2_ref[...],
                     preferred_element_type=jnp.float32) + b2
        h2b = h2.astype(jnp.bfloat16)
        h2_buf[pl.ds(row0, tm), :] = h2b
        st2_ref[...] += stats(h2b.astype(jnp.float32))

    # ---------------- phase 2: BN2 + ReLU + Linear(H2, 1) head --------------
    @pl.when(p == 2)
    def _():
        gamma = vec3_ref[:, 0:h2dim]
        beta = vec3_ref[:, h2dim:2 * h2dim]
        w3r = vec3_ref[:, 2 * h2dim:3 * h2dim]
        b3 = vec3_ref[:, 3 * h2dim:3 * h2dim + 1]

        mean = st2_ref[0:1, :] * inv_b
        var = st2_ref[1:2, :] * inv_b - mean * mean
        scale = gamma * jax.lax.rsqrt(var + EPS)
        shift = beta - mean * scale

        h2f = h2_buf[pl.ds(row0, tm), :].astype(jnp.float32)
        a = jnp.maximum(h2f * scale + shift, 0.0)           # (tm, H2)

        # Lane-dense head: (8, tm) = w3_bcast @ a^T on the MXU, keep row 0.
        w3b = jnp.broadcast_to(w3r, (8, h2dim)).astype(jnp.bfloat16)
        s = jax.lax.dot_general(w3b, a.astype(jnp.bfloat16),
                                (((1,), (1,)), ((), ())),
                                preferred_element_type=jnp.float32)
        out_ref[...] = s[0:1, :] + b3                       # (1, tm)


# --------------------------------------------------------------------------
# Wrapper
# --------------------------------------------------------------------------
def docking_forward(drug_x, ptn_x, kp):
    B, DIN = drug_x.shape
    PIN = ptn_x.shape[1]
    Ddim = kp["wd"].shape[1]
    Pdim = kp["wp"].shape[1]
    H1 = kp["w1d"].shape[1]
    H2 = kp["w2"].shape[1]

    if B <= 1024:
        TM = _round_up(B, 8)       # single tile (T == 1)
    else:
        TM = 1024                  # streamed tiles; multiple of 128 for lane-dense output
    B_pad = _round_up(B, TM)
    T = B_pad // TM

    resident = B_pad * (H1 + H2) * 2   # bf16 bytes of VMEM-resident intermediates
    if resident > 40 * 1024 * 1024:
        # TODO(synk): multi-pass HBM-intermediate fallback for very large batches
        raise NotImplementedError("batch too large for fused VMEM-resident kernel")

    dx = drug_x.astype(jnp.bfloat16)
    px = ptn_x.astype(jnp.bfloat16)
    if B_pad != B:
        dx = jnp.pad(dx, ((0, B_pad - B), (0, 0)))
        px = jnp.pad(px, ((0, B_pad - B), (0, 0)))

    cparams = pltpu.CompilerParams(
        dimension_semantics=("arbitrary", "arbitrary"),
        # 48 MiB fits v7x's 64 MiB physical VMEM; v5e/v6e (128 MiB) could go higher.
        vmem_limit_bytes=48 * 1024 * 1024,
    )

    def full_spec(shape):
        return pl.BlockSpec(shape, lambda p, t: (0,) * len(shape))

    def tile_spec(shape, phase):
        # stream tile t only during `phase`; pin block 0 otherwise (no re-stream)
        return pl.BlockSpec(shape, lambda p, t: (jnp.where(p == phase, t, 0), 0))

    kern = functools.partial(_fused_kernel, tm=TM, batch=B,
                             ddim=Ddim, pdim=Pdim, h1dim=H1, h2dim=H2,
                             masked=(B_pad != B))

    out_row = pl.pallas_call(
        kern,
        grid=(3, T),
        in_specs=[
            tile_spec((TM, DIN), 0),                 # dx  (streamed, phase 0)
            tile_spec((TM, PIN), 0),                 # px  (streamed, phase 0)
            full_spec((DIN, Ddim)),                  # wd  (VMEM-resident)
            full_spec((PIN, Pdim)),                  # wp
            full_spec((Ddim, H1)),                   # w1d
            full_spec((Pdim, H1)),                   # w1p
            full_spec((H1, H2)),                     # w2
            full_spec((1, Ddim + Pdim + H1)),        # vec1: bd|bp|b1
            full_spec((1, 2 * H1 + H2)),             # vec2: g1|be1|b2
            full_spec((1, 3 * H2 + 128)),            # vec3: g2|be2|w3|b3|pad
        ],
        out_specs=pl.BlockSpec((1, TM),
                               lambda p, t: (0, jnp.where(p == 2, t, 0))),
        out_shape=jax.ShapeDtypeStruct((1, B_pad), jnp.float32),
        scratch_shapes=[
            pltpu.VMEM((B_pad, H1), jnp.bfloat16),   # resident h1
            pltpu.VMEM((B_pad, H2), jnp.bfloat16),   # resident h2
            pltpu.VMEM((2, H1), jnp.float32),        # h1 sum / sumsq
            pltpu.VMEM((2, H2), jnp.float32),        # h2 sum / sumsq
        ],
        compiler_params=cparams,
    )(dx, px, kp["wd"], kp["wp"], kp["w1d"], kp["w1p"], kp["w2"],
      kp["vec1"], kp["vec2"], kp["vec3"])

    return out_row[0, :B].reshape(B, 1)


# --------------------------------------------------------------------------
# Parameters
# --------------------------------------------------------------------------
def make_params(key, drug_in, ptn_in, Ddim, Pdim):
    ks = jax.random.split(key, 5)

    def lin(k, fi, fo):
        bound = 1.0 / (fi ** 0.5)
        kw, kb = jax.random.split(k)
        w = jax.random.uniform(kw, (fi, fo), jnp.float32, -bound, bound)
        b = jax.random.uniform(kb, (1, fo), jnp.float32, -bound, bound)
        return w, b

    wd, bd = lin(ks[0], drug_in, Ddim)          # drug encoder (modeled)
    wp, bp = lin(ks[1], ptn_in, Pdim)           # protein encoder (modeled)
    w1, b1 = lin(ks[2], Ddim + Pdim, 256)
    w1d, w1p = w1[:Ddim], w1[Ddim:]
    g1 = jnp.ones((1, 256), jnp.float32)
    be1 = jnp.zeros((1, 256), jnp.float32)
    w2, b2 = lin(ks[3], 256, 128)
    g2 = jnp.ones((1, 128), jnp.float32)
    be2 = jnp.zeros((1, 128), jnp.float32)
    w3, b3 = lin(ks[4], 128, 1)
    return (wd, bd, wp, bp, w1d, w1p, b1, g1, be1, w2, b2, g2, be2, w3, b3)


def pack_params(raw):
    (wd, bd, wp, bp, w1d, w1p, b1, g1, be1, w2, b2, g2, be2, w3, b3) = raw
    bf = lambda w: w.astype(jnp.bfloat16)
    vec1 = jnp.concatenate([bd, bp, b1], axis=1)                        # (1, Ddim+Pdim+256)
    vec2 = jnp.concatenate([g1, be1, b2], axis=1)                       # (1, 640)
    vec3 = jnp.concatenate([g2, be2, w3.reshape(1, -1), b3,
                            jnp.zeros((1, 127), jnp.float32)], axis=1)  # (1, 512)
    return {"wd": bf(wd), "wp": bf(wp), "w1d": bf(w1d), "w1p": bf(w1p),
            "w2": bf(w2), "vec1": vec1, "vec2": vec2, "vec3": vec3}


# --------------------------------------------------------------------------
# Pure-JAX reference (mirrors bf16 matmuls and bf16-rounded intermediates,
# BatchNorm in training mode / biased variance like the PyTorch module)
# --------------------------------------------------------------------------
def reference_forward(drug_x, ptn_x, raw):
    (wd, bd, wp, bp, w1d, w1p, b1, g1, be1, w2, b2, g2, be2, w3, b3) = raw

    def mm(x, w):
        return jnp.dot(x.astype(jnp.bfloat16), w.astype(jnp.bfloat16),
                       preferred_element_type=jnp.float32)

    dv = mm(drug_x, wd) + bd
    pv = mm(ptn_x, wp) + bp
    h1 = mm(dv, w1d) + mm(pv, w1p) + b1
    h1 = h1.astype(jnp.bfloat16).astype(jnp.float32)
    mu, var = h1.mean(0, keepdims=True), h1.var(0, keepdims=True)
    h1 = jnp.maximum((h1 - mu) * jax.lax.rsqrt(var + EPS) * g1 + be1, 0.0)
    h2 = mm(h1, w2) + b2
    h2 = h2.astype(jnp.bfloat16).astype(jnp.float32)
    mu, var = h2.mean(0, keepdims=True), h2.var(0, keepdims=True)
    h2 = jnp.maximum((h2 - mu) * jax.lax.rsqrt(var + EPS) * g2 + be2, 0.0)
    return mm(h2, w3) + b3


if __name__ == "__main__":
    # small shapes: batch=8, drug raw features=64, protein raw features=32
    B, DRUG_IN, PTN_IN = 8, 64, 32
    Ddim, Pdim = 512, 256   # module defaults

    key = jax.random.PRNGKey(0)
    k_dx, k_px, k_params = jax.random.split(key, 3)
    drug_x = jax.random.normal(k_dx, (B, DRUG_IN), jnp.float32)
    ptn_x = jax.random.normal(k_px, (B, PTN_IN), jnp.float32)

    raw = make_params(k_params, DRUG_IN, PTN_IN, Ddim, Pdim)
    kp = pack_params(raw)

    fwd = jax.jit(docking_forward)
    out = jax.block_until_ready(fwd(drug_x, ptn_x, kp))
    ref = jax.block_until_ready(reference_forward(drug_x, ptn_x, raw))

    assert out.shape == (B, 1)
    max_err = float(jnp.max(jnp.abs(out - ref)))
    assert jnp.allclose(out, ref, atol=2e-2, rtol=2e-2), max_err

    print("KERNEL_OK")
</pallas_src>

<mosaic_0001>
module attributes {stable_mosaic.version = 11 : i64} {
  func.func @_fused_kernel(%arg0: i32, %arg1: i32, %arg2: memref<8x64xbf16, #tpu.memory_space<vmem>>, %arg3: memref<8x32xbf16, #tpu.memory_space<vmem>>, %arg4: memref<64x512xbf16, #tpu.memory_space<vmem>>, %arg5: memref<32x256xbf16, #tpu.memory_space<vmem>>, %arg6: memref<512x256xbf16, #tpu.memory_space<vmem>>, %arg7: memref<256x256xbf16, #tpu.memory_space<vmem>>, %arg8: memref<256x128xbf16, #tpu.memory_space<vmem>>, %arg9: memref<1x1024xf32, #tpu.memory_space<vmem>>, %arg10: memref<1x640xf32, #tpu.memory_space<vmem>>, %arg11: memref<1x512xf32, #tpu.memory_space<vmem>>, %arg12: memref<1x8xf32, #tpu.memory_space<vmem>>, %arg13: memref<8x256xbf16, #tpu.memory_space<vmem>>, %arg14: memref<8x128xbf16, #tpu.memory_space<vmem>>, %arg15: memref<2x256xf32, #tpu.memory_space<vmem>>, %arg16: memref<2x128xf32, #tpu.memory_space<vmem>>) attributes {dimension_semantics = [#tpu.dimension_semantics<arbitrary>, #tpu.dimension_semantics<arbitrary>], iteration_bounds = array<i64: 3, 1>, scalar_prefetch = 0 : i64, scratch_operands = 4 : i64, tpu.core_type = #tpu.core_type<tc>, window_params = [{transform_indices = @transform_0, window_bounds = array<i64: 8, 64>}, {transform_indices = @transform_1, window_bounds = array<i64: 8, 32>}, {pipeline_mode = #tpu.pipeline_mode<synchronous>, transform_indices = @transform_2, window_bounds = array<i64: 64, 512>}, {pipeline_mode = #tpu.pipeline_mode<synchronous>, transform_indices = @transform_3, window_bounds = array<i64: 32, 256>}, {pipeline_mode = #tpu.pipeline_mode<synchronous>, transform_indices = @transform_4, window_bounds = array<i64: 512, 256>}, {pipeline_mode = #tpu.pipeline_mode<synchronous>, transform_indices = @transform_5, window_bounds = array<i64: 256, 256>}, {pipeline_mode = #tpu.pipeline_mode<synchronous>, transform_indices = @transform_6, window_bounds = array<i64: 256, 128>}, {pipeline_mode = #tpu.pipeline_mode<synchronous>, transform_indices = @transform_7, window_bounds = array<i64: 1, 1024>}, {pipeline_mode = #tpu.pipeline_mode<synchronous>, transform_indices = @transform_8, window_bounds = array<i64: 1, 640>}, {pipeline_mode = #tpu.pipeline_mode<synchronous>, transform_indices = @transform_9, window_bounds = array<i64: 1, 512>}, {transform_indices = @transform_10, window_bounds = array<i64: 1, 8>}]} {
    %c8_i32 = arith.constant 8 : i32
    %0 = arith.muli %arg1, %c8_i32 : i32
    %1 = tpu.assume_multiple %0, 8 : i32
    %c0_i32 = arith.constant 0 : i32
    %2 = arith.cmpi eq, %arg0, %c0_i32 : i32
    %3 = arith.extui %2 : i1 to i32
    %c0_i32_0 = arith.constant 0 : i32
    %4 = arith.cmpi ne, %3, %c0_i32_0 : i32
    scf.if %4 {
      %c0_i32_3 = arith.constant 0 : i32
      %11 = arith.cmpi eq, %arg1, %c0_i32_3 : i32
      %12 = arith.extui %11 : i1 to i32
      %c0_i32_4 = arith.constant 0 : i32
      %13 = arith.cmpi ne, %12, %c0_i32_4 : i32
      scf.if %13 {
        %cst_30 = arith.constant 0.000000e+00 : f32
        %49 = vector.broadcast %cst_30 : f32 to vector<2x256xf32>
        %c0_31 = arith.constant 0 : index
        %c0_32 = arith.constant 0 : index
        %50 = vector.load %arg15[%c0_31, %c0_32] : memref<2x256xf32, #tpu.memory_space<vmem>>, vector<2x256xf32>
        tpu.vector_store %arg15[%c0_31, %c0_32], %49 {strides = array<i32>} : memref<2x256xf32, #tpu.memory_space<vmem>>, vector<2x256xf32>,
        %cst_33 = arith.constant 0.000000e+00 : f32
        %51 = vector.broadcast %cst_33 : f32 to vector<2x128xf32>
        %c0_34 = arith.constant 0 : index
        %c0_35 = arith.constant 0 : index
        %52 = vector.load %arg16[%c0_34, %c0_35] : memref<2x128xf32, #tpu.memory_space<vmem>>, vector<2x128xf32>
        tpu.vector_store %arg16[%c0_34, %c0_35], %51 {strides = array<i32>} : memref<2x128xf32, #tpu.memory_space<vmem>>, vector<2x128xf32>,
      } else {
      }
      %c0 = arith.constant 0 : index
      %c0_5 = arith.constant 0 : index
      %14 = vector.load %arg9[%c0, %c0_5] : memref<1x1024xf32, #tpu.memory_space<vmem>>, vector<1x512xf32>
      %c0_6 = arith.constant 0 : index
      %c512 = arith.constant 512 : index
      %15 = vector.load %arg9[%c0_6, %c512] : memref<1x1024xf32, #tpu.memory_space<vmem>>, vector<1x256xf32>
      %c0_7 = arith.constant 0 : index
      %c768 = arith.constant 768 : index
      %16 = vector.load %arg9[%c0_7, %c768] : memref<1x1024xf32, #tpu.memory_space<vmem>>, vector<1x256xf32>
      %c0_8 = arith.constant 0 : index
      %c0_9 = arith.constant 0 : index
      %17 = vector.load %arg2[%c0_8, %c0_9] : memref<8x64xbf16, #tpu.memory_space<vmem>>, vector<8x64xbf16>
      %c0_10 = arith.constant 0 : index
      %c0_11 = arith.constant 0 : index
      %18 = vector.load %arg4[%c0_10, %c0_11] : memref<64x512xbf16, #tpu.memory_space<vmem>>, vector<64x512xbf16>
      %cst = arith.constant dense<0.000000e+00> : vector<8x512xf32>
      %19 = tpu.matmul %17, %18, %cst {dimension_numbers = #tpu.dot_dimension_numbers<[1], [0], [0], [1], [0, 0, 1, 1], [], []>} : vector<8x64xbf16>, vector<64x512xbf16>, vector<8x512xf32> -> vector<8x512xf32>
      %20 = vector.broadcast %14 : vector<1x512xf32> to vector<8x512xf32>
      %21 = arith.addf %19, %20 : vector<8x512xf32>
      %c0_12 = arith.constant 0 : index
      %c0_13 = arith.constant 0 : index
      %22 = vector.load %arg3[%c0_12, %c0_13] : memref<8x32xbf16, #tpu.memory_space<vmem>>, vector<8x32xbf16>
      %c0_14 = arith.constant 0 : index
      %c0_15 = arith.constant 0 : index
      %23 = vector.load %arg5[%c0_14, %c0_15] : memref<32x256xbf16, #tpu.memory_space<vmem>>, vector<32x256xbf16>
      %cst_16 = arith.constant dense<0.000000e+00> : vector<8x256xf32>
      %24 = tpu.matmul %22, %23, %cst_16 {dimension_numbers = #tpu.dot_dimension_numbers<[1], [0], [0], [1], [0, 0, 1, 1], [], []>} : vector<8x32xbf16>, vector<32x256xbf16>, vector<8x256xf32> -> vector<8x256xf32>
      %25 = vector.broadcast %15 : vector<1x256xf32> to vector<8x256xf32>
      %26 = arith.addf %24, %25 : vector<8x256xf32>
      %27 = arith.truncf %21 : vector<8x512xf32> to vector<8x512xbf16>
      %c0_17 = arith.constant 0 : index
      %c0_18 = arith.constant 0 : index
      %28 = vector.load %arg6[%c0_17, %c0_18] : memref<512x256xbf16, #tpu.memory_space<vmem>>, vector<512x256xbf16>
      %cst_19 = arith.constant dense<0.000000e+00> : vector<8x256xf32>
      %29 = tpu.matmul %27, %28, %cst_19 {dimension_numbers = #tpu.dot_dimension_numbers<[1], [0], [0], [1], [0, 0, 1, 1], [], []>} : vector<8x512xbf16>, vector<512x256xbf16>, vector<8x256xf32> -> vector<8x256xf32>
      %30 = arith.truncf %26 : vector<8x256xf32> to vector<8x256xbf16>
      %c0_20 = arith.constant 0 : index
      %c0_21 = arith.constant 0 : index
      %31 = vector.load %arg7[%c0_20, %c0_21] : memref<256x256xbf16, #tpu.memory_space<vmem>>, vector<256x256xbf16>
      %cst_22 = arith.constant dense<0.000000e+00> : vector<8x256xf32>
      %32 = tpu.matmul %30, %31, %cst_22 {dimension_numbers = #tpu.dot_dimension_numbers<[1], [0], [0], [1], [0, 0, 1, 1], [], []>} : vector<8x256xbf16>, vector<256x256xbf16>, vector<8x256xf32> -> vector<8x256xf32>
      %33 = arith.addf %29, %32 : vector<8x256xf32>
      %34 = vector.broadcast %16 : vector<1x256xf32> to vector<8x256xf32>
      %35 = arith.addf %33, %34 : vector<8x256xf32>
      %36 = arith.truncf %35 : vector<8x256xf32> to vector<8x256xbf16>
      %37 = arith.index_cast %1 : i32 to index
      %c0_23 = arith.constant 0 : index
      %38 = vector.load %arg13[%37, %c0_23] : memref<8x256xbf16, #tpu.memory_space<vmem>>, vector<8x256xbf16>
      tpu.vector_store %arg13[%37, %c0_23], %36 {strides = array<i32>} : memref<8x256xbf16, #tpu.memory_space<vmem>>, vector<8x256xbf16>,
      %c0_24 = arith.constant 0 : index
      %c0_25 = arith.constant 0 : index
      %39 = vector.load %arg15[%c0_24, %c0_25] : memref<2x256xf32, #tpu.memory_space<vmem>>, vector<2x256xf32>
      %40 = arith.extf %36 : vector<8x256xbf16> to vector<8x256xf32>
      %cst_26 = arith.constant dense<0.000000e+00> : vector<256xf32>
      %41 = vector.multi_reduction <add>, %40, %cst_26 [0] : vector<8x256xf32> to vector<256xf32>
      %42 = vector.shape_cast %41 : vector<256xf32> to vector<1x256xf32>
      %43 = arith.mulf %40, %40 : vector<8x256xf32>
      %cst_27 = arith.constant dense<0.000000e+00> : vector<256xf32>
      %44 = vector.multi_reduction <add>, %43, %cst_27 [0] : vector<8x256xf32> to vector<256xf32>
      %45 = vector.shape_cast %44 : vector<256xf32> to vector<1x256xf32>
      %46 = tpu.concatenate %42, %45 in 0 : vector<1x256xf32>, vector<1x256xf32> -> vector<2x256xf32>
      %47 = arith.addf %39, %46 : vector<2x256xf32>
      %c0_28 = arith.constant 0 : index
      %c0_29 = arith.constant 0 : index
      %48 = vector.load %arg15[%c0_28, %c0_29] : memref<2x256xf32, #tpu.memory_space<vmem>>, vector<2x256xf32>
      tpu.vector_store %arg15[%c0_28, %c0_29], %47 {strides = array<i32>} : memref<2x256xf32, #tpu.memory_space<vmem>>, vector<2x256xf32>,
    } else {
    }
    %c1_i32 = arith.constant 1 : i32
    %5 = arith.cmpi eq, %arg0, %c1_i32 : i32
    %6 = arith.extui %5 : i1 to i32
    %c0_i32_1 = arith.constant 0 : i32
    %7 = arith.cmpi ne, %6, %c0_i32_1 : i32
    scf.if %7 {
      %c0 = arith.constant 0 : index
      %c0_3 = arith.constant 0 : index
      %11 = vector.load %arg10[%c0, %c0_3] : memref<1x640xf32, #tpu.memory_space<vmem>>, vector<1x256xf32>
      %c0_4 = arith.constant 0 : index
      %c256 = arith.constant 256 : index
      %12 = vector.load %arg10[%c0_4, %c256] : memref<1x640xf32, #tpu.memory_space<vmem>>, vector<1x256xf32>
      %c0_5 = arith.constant 0 : index
      %c512 = arith.constant 512 : index
      %13 = vector.load %arg10[%c0_5, %c512] : memref<1x640xf32, #tpu.memory_space<vmem>>, vector<1x128xf32>
      %c0_6 = arith.constant 0 : index
      %c0_7 = arith.constant 0 : index
      %14 = vector.load %arg15[%c0_6, %c0_7] : memref<2x256xf32, #tpu.memory_space<vmem>>, vector<1x256xf32>
      %cst = arith.constant 1.250000e-01 : f32
      %15 = vector.broadcast %cst : f32 to vector<1x256xf32>
      %16 = arith.mulf %14, %15 : vector<1x256xf32>
      %c1 = arith.constant 1 : index
      %c0_8 = arith.constant 0 : index
      %17 = vector.load %arg15[%c1, %c0_8] : memref<2x256xf32, #tpu.memory_space<vmem>>, vector<1x256xf32>
      %cst_9 = arith.constant 1.250000e-01 : f32
      %18 = vector.broadcast %cst_9 : f32 to vector<1x256xf32>
      %19 = arith.mulf %17, %18 : vector<1x256xf32>
      %20 = arith.mulf %16, %16 : vector<1x256xf32>
      %21 = arith.subf %19, %20 : vector<1x256xf32>
      %cst_10 = arith.constant 9.99999974E-6 : f32
      %22 = vector.broadcast %cst_10 : f32 to vector<1x256xf32>
      %23 = arith.addf %21, %22 : vector<1x256xf32>
      %24 = math.rsqrt %23 : vector<1x256xf32>
      %25 = arith.mulf %11, %24 : vector<1x256xf32>
      %26 = arith.mulf %16, %25 : vector<1x256xf32>
      %27 = arith.subf %12, %26 : vector<1x256xf32>
      %28 = arith.index_cast %1 : i32 to index
      %c0_11 = arith.constant 0 : index
      %29 = vector.load %arg13[%28, %c0_11] : memref<8x256xbf16, #tpu.memory_space<vmem>>, vector<8x256xbf16>
      %30 = arith.extf %29 : vector<8x256xbf16> to vector<8x256xf32>
      %31 = vector.broadcast %25 : vector<1x256xf32> to vector<8x256xf32>
      %32 = arith.mulf %30, %31 : vector<8x256xf32>
      %33 = vector.broadcast %27 : vector<1x256xf32> to vector<8x256xf32>
      %34 = arith.addf %32, %33 : vector<8x256xf32>
      %cst_12 = arith.constant 0.000000e+00 : f32
      %35 = vector.broadcast %cst_12 : f32 to vector<8x256xf32>
      %36 = arith.maximumf %34, %35 : vector<8x256xf32>
      %37 = arith.truncf %36 : vector<8x256xf32> to vector<8x256xbf16>
      %c0_13 = arith.constant 0 : index
      %c0_14 = arith.constant 0 : index
      %38 = vector.load %arg8[%c0_13, %c0_14] : memref<256x128xbf16, #tpu.memory_space<vmem>>, vector<256x128xbf16>
      %cst_15 = arith.constant dense<0.000000e+00> : vector<8x128xf32>
      %39 = tpu.matmul %37, %38, %cst_15 {dimension_numbers = #tpu.dot_dimension_numbers<[1], [0], [0], [1], [0, 0, 1, 1], [], []>} : vector<8x256xbf16>, vector<256x128xbf16>, vector<8x128xf32> -> vector<8x128xf32>
      %40 = vector.broadcast %13 : vector<1x128xf32> to vector<8x128xf32>
      %41 = arith.addf %39, %40 : vector<8x128xf32>
      %42 = arith.truncf %41 : vector<8x128xf32> to vector<8x128xbf16>
      %43 = arith.index_cast %1 : i32 to index
      %c0_16 = arith.constant 0 : index
      %44 = vector.load %arg14[%43, %c0_16] : memref<8x128xbf16, #tpu.memory_space<vmem>>, vector<8x128xbf16>
      tpu.vector_store %arg14[%43, %c0_16], %42 {strides = array<i32>} : memref<8x128xbf16, #tpu.memory_space<vmem>>, vector<8x128xbf16>,
      %c0_17 = arith.constant 0 : index
      %c0_18 = arith.constant 0 : index
      %45 = vector.load %arg16[%c0_17, %c0_18] : memref<2x128xf32, #tpu.memory_space<vmem>>, vector<2x128xf32>
      %46 = arith.extf %42 : vector<8x128xbf16> to vector<8x128xf32>
      %cst_19 = arith.constant dense<0.000000e+00> : vector<128xf32>
      %47 = vector.multi_reduction <add>, %46, %cst_19 [0] : vector<8x128xf32> to vector<128xf32>
      %48 = vector.shape_cast %47 : vector<128xf32> to vector<1x128xf32>
      %49 = arith.mulf %46, %46 : vector<8x128xf32>
      %cst_20 = arith.constant dense<0.000000e+00> : vector<128xf32>
      %50 = vector.multi_reduction <add>, %49, %cst_20 [0] : vector<8x128xf32> to vector<128xf32>
      %51 = vector.shape_cast %50 : vector<128xf32> to vector<1x128xf32>
      %52 = tpu.concatenate %48, %51 in 0 : vector<1x128xf32>, vector<1x128xf32> -> vector<2x128xf32>
      %53 = arith.addf %45, %52 : vector<2x128xf32>
      %c0_21 = arith.constant 0 : index
      %c0_22 = arith.constant 0 : index
      %54 = vector.load %arg16[%c0_21, %c0_22] : memref<2x128xf32, #tpu.memory_space<vmem>>, vector<2x128xf32>
      tpu.vector_store %arg16[%c0_21, %c0_22], %53 {strides = array<i32>} : memref<2x128xf32, #tpu.memory_space<vmem>>, vector<2x128xf32>,
    } else {
    }
    %c2_i32 = arith.constant 2 : i32
    %8 = arith.cmpi eq, %arg0, %c2_i32 : i32
    %9 = arith.extui %8 : i1 to i32
    %c0_i32_2 = arith.constant 0 : i32
    %10 = arith.cmpi ne, %9, %c0_i32_2 : i32
    scf.if %10 {
      %c0 = arith.constant 0 : index
      %c0_3 = arith.constant 0 : index
      %11 = vector.load %arg11[%c0, %c0_3] : memref<1x512xf32, #tpu.memory_space<vmem>>, vector<1x128xf32>
      %c0_4 = arith.constant 0 : index
      %c128 = arith.constant 128 : index
      %12 = vector.load %arg11[%c0_4, %c128] : memref<1x512xf32, #tpu.memory_space<vmem>>, vector<1x128xf32>
      %c0_5 = arith.constant 0 : index
      %c256 = arith.constant 256 : index
      %13 = vector.load %arg11[%c0_5, %c256] : memref<1x512xf32, #tpu.memory_space<vmem>>, vector<1x128xf32>
      %c0_6 = arith.constant 0 : index
      %c384 = arith.constant 384 : index
      %14 = vector.load %arg11[%c0_6, %c384] : memref<1x512xf32, #tpu.memory_space<vmem>>, vector<1x1xf32>
      %c0_7 = arith.constant 0 : index
      %c0_8 = arith.constant 0 : index
      %15 = vector.load %arg16[%c0_7, %c0_8] : memref<2x128xf32, #tpu.memory_space<vmem>>, vector<1x128xf32>
      %cst = arith.constant 1.250000e-01 : f32
      %16 = vector.broadcast %cst : f32 to vector<1x128xf32>
      %17 = arith.mulf %15, %16 : vector<1x128xf32>
      %c1 = arith.constant 1 : index
      %c0_9 = arith.constant 0 : index
      %18 = vector.load %arg16[%c1, %c0_9] : memref<2x128xf32, #tpu.memory_space<vmem>>, vector<1x128xf32>
      %cst_10 = arith.constant 1.250000e-01 : f32
      %19 = vector.broadcast %cst_10 : f32 to vector<1x128xf32>
      %20 = arith.mulf %18, %19 : vector<1x128xf32>
      %21 = arith.mulf %17, %17 : vector<1x128xf32>
      %22 = arith.subf %20, %21 : vector<1x128xf32>
      %cst_11 = arith.constant 9.99999974E-6 : f32
      %23 = vector.broadcast %cst_11 : f32 to vector<1x128xf32>
      %24 = arith.addf %22, %23 : vector<1x128xf32>
      %25 = math.rsqrt %24 : vector<1x128xf32>
      %26 = arith.mulf %11, %25 : vector<1x128xf32>
      %27 = arith.mulf %17, %26 : vector<1x128xf32>
      %28 = arith.subf %12, %27 : vector<1x128xf32>
      %29 = arith.index_cast %1 : i32 to index
      %c0_12 = arith.constant 0 : index
      %30 = vector.load %arg14[%29, %c0_12] : memref<8x128xbf16, #tpu.memory_space<vmem>>, vector<8x128xbf16>
      %31 = arith.extf %30 : vector<8x128xbf16> to vector<8x128xf32>
      %32 = vector.broadcast %26 : vector<1x128xf32> to vector<8x128xf32>
      %33 = arith.mulf %31, %32 : vector<8x128xf32>
      %34 = vector.broadcast %28 : vector<1x128xf32> to vector<8x128xf32>
      %35 = arith.addf %33, %34 : vector<8x128xf32>
      %cst_13 = arith.constant 0.000000e+00 : f32
      %36 = vector.broadcast %cst_13 : f32 to vector<8x128xf32>
      %37 = arith.maximumf %35, %36 : vector<8x128xf32>
      %38 = vector.shape_cast %13 : vector<1x128xf32> to vector<1x128xf32>
      %39 = vector.broadcast %38 : vector<1x128xf32> to vector<8x128xf32>
      %40 = arith.truncf %39 : vector<8x128xf32> to vector<8x128xbf16>
      %41 = arith.truncf %37 : vector<8x128xf32> to vector<8x128xbf16>
      %cst_14 = arith.constant dense<0.000000e+00> : vector<8x8xf32>
      %42 = tpu.matmul %40, %41, %cst_14 {dimension_numbers = #tpu.dot_dimension_numbers<[1], [1], [0], [0], [0, 0, 1, 0], [], []>} : vector<8x128xbf16>, vector<8x128xbf16>, vector<8x8xf32> -> vector<8x8xf32>
      %43 = vector.extract_strided_slice %42 {offsets = [0, 0], sizes = [1, 8], strides = [1, 1]} : vector<8x8xf32> to vector<1x8xf32>
      %44 = vector.broadcast %14 : vector<1x1xf32> to vector<1x8xf32>
      %45 = arith.addf %43, %44 : vector<1x8xf32>
      %c0_15 = arith.constant 0 : index
      %c0_16 = arith.constant 0 : index
      %46 = vector.load %arg12[%c0_15, %c0_16] : memref<1x8xf32, #tpu.memory_space<vmem>>, vector<1x8xf32>
      tpu.vector_store %arg12[%c0_15, %c0_16], %45 {strides = array<i32>} : memref<1x8xf32, #tpu.memory_space<vmem>>, vector<1x8xf32>,
    } else {
    }
    return
  }
  func.func @transform_0(%arg0: i32, %arg1: i32) -> (i32, i32) {
    %c0_i32 = arith.constant 0 : i32
    %0 = arith.cmpi eq, %arg0, %c0_i32 : i32
    %c0_i32_0 = arith.constant 0 : i32
    %1 = arith.select %0, %arg1, %c0_i32_0 : i32
    %c0_i32_1 = arith.constant 0 : i32
    %c0_i32_2 = arith.constant 0 : i32
    return %1, %c0_i32_1 : i32, i32
  }
  func.func @transform_1(%arg0: i32, %arg1: i32) -> (i32, i32) {
    %c0_i32 = arith.constant 0 : i32
    %0 = arith.cmpi eq, %arg0, %c0_i32 : i32
    %c0_i32_0 = arith.constant 0 : i32
    %1 = arith.select %0, %arg1, %c0_i32_0 : i32
    %c0_i32_1 = arith.constant 0 : i32
    %c0_i32_2 = arith.constant 0 : i32
    return %1, %c0_i32_1 : i32, i32
  }
  func.func @transform_2(%arg0: i32, %arg1: i32) -> (i32, i32) {
    %c0_i32 = arith.constant 0 : i32
    %c0_i32_0 = arith.constant 0 : i32
    %c0_i32_1 = arith.constant 0 : i32
    return %c0_i32, %c0_i32_0 : i32, i32
  }
  func.func @transform_3(%arg0: i32, %arg1: i32) -> (i32, i32) {
    %c0_i32 = arith.constant 0 : i32
    %c0_i32_0 = arith.constant 0 : i32
    %c0_i32_1 = arith.constant 0 : i32
    return %c0_i32, %c0_i32_0 : i32, i32
  }
  func.func @transform_4(%arg0: i32, %arg1: i32) -> (i32, i32) {
    %c0_i32 = arith.constant 0 : i32
    %c0_i32_0 = arith.constant 0 : i32
    %c0_i32_1 = arith.constant 0 : i32
    return %c0_i32, %c0_i32_0 : i32, i32
  }
  func.func @transform_5(%arg0: i32, %arg1: i32) -> (i32, i32) {
    %c0_i32 = arith.constant 0 : i32
    %c0_i32_0 = arith.constant 0 : i32
    %c0_i32_1 = arith.constant 0 : i32
    return %c0_i32, %c0_i32_0 : i32, i32
  }
  func.func @transform_6(%arg0: i32, %arg1: i32) -> (i32, i32) {
    %c0_i32 = arith.constant 0 : i32
    %c0_i32_0 = arith.constant 0 : i32
    %c0_i32_1 = arith.constant 0 : i32
    return %c0_i32, %c0_i32_0 : i32, i32
  }
  func.func @transform_7(%arg0: i32, %arg1: i32) -> (i32, i32) {
    %c0_i32 = arith.constant 0 : i32
    %c0_i32_0 = arith.constant 0 : i32
    %c0_i32_1 = arith.constant 0 : i32
    return %c0_i32, %c0_i32_0 : i32, i32
  }
  func.func @transform_8(%arg0: i32, %arg1: i32) -> (i32, i32) {
    %c0_i32 = arith.constant 0 : i32
    %c0_i32_0 = arith.constant 0 : i32
    %c0_i32_1 = arith.constant 0 : i32
    return %c0_i32, %c0_i32_0 : i32, i32
  }
  func.func @transform_9(%arg0: i32, %arg1: i32) -> (i32, i32) {
    %c0_i32 = arith.constant 0 : i32
    %c0_i32_0 = arith.constant 0 : i32
    %c0_i32_1 = arith.constant 0 : i32
    return %c0_i32, %c0_i32_0 : i32, i32
  }
  func.func @transform_10(%arg0: i32, %arg1: i32) -> (i32, i32) {
    %c2_i32 = arith.constant 2 : i32
    %0 = arith.cmpi eq, %arg0, %c2_i32 : i32
    %c0_i32 = arith.constant 0 : i32
    %1 = arith.select %0, %arg1, %c0_i32 : i32
    %c0_i32_0 = arith.constant 0 : i32
    %c0_i32_1 = arith.constant 0 : i32
    return %c0_i32_0, %1 : i32, i32
  }
}

</mosaic_0001>

<llo_original>
// kernel: docking_forward.1
$region0: #{docking_forward.1}
  #allocation0 [shape = 'u32[]', space=smem, size = 0x4, offset = 0x4, fixed_abs, tag = 'smem constant byte address 0x4 - core index']
  #allocation1 [shape = 'u32[144,128]{1,0:T(1,128)}', space=vmem, size = 0x12000, scoped, tag = 'internal scratch']
  #allocation2 [shape = 'bf16[8,256]{1,0:T(8,128)(2,1)}', space=vmem, size = 0x1000, scoped, tag = 'scratch operand']
  #allocation3 [shape = 'bf16[8,128]{1,0:T(8,128)(2,1)}', space=vmem, size = 0x800, scoped, tag = 'scratch operand']
  #allocation4 [shape = 'f32[2,256]{1,0:T(2,128)}', space=vmem, size = 0x800, scoped, tag = 'scratch operand']
  #allocation5 [shape = 'f32[2,128]{1,0:T(2,128)}', space=vmem, size = 0x400, scoped, tag = 'scratch operand']
  %s0 = inlined_call_operand.vmem [shape: bf16[8,64], index: 0, kind: input, shape index: {}]
  %s1 = inlined_call_operand.vmem [shape: bf16[8,32], index: 1, kind: input, shape index: {}]
  %s2 = inlined_call_operand.hbm [shape: bf16[64,512], index: 2, kind: input, shape index: {}]
  %s3 = inlined_call_operand.vmem [shape: bf16[32,256], index: 3, kind: input, shape index: {}]
  %s4 = inlined_call_operand.hbm [shape: bf16[512,256], index: 4, kind: input, shape index: {}]
  %s5 = inlined_call_operand.hbm [shape: bf16[256,256], index: 5, kind: input, shape index: {}]
  %s6 = inlined_call_operand.hbm [shape: bf16[256,128], index: 6, kind: input, shape index: {}]
  %s7 = inlined_call_operand.vmem [shape: f32[1,1024], index: 7, kind: input, shape index: {}]
  %s8 = inlined_call_operand.hbm [shape: f32[1,640], index: 8, kind: input, shape index: {}]
  %s9 = inlined_call_operand.hbm [shape: f32[1,512], index: 9, kind: input, shape index: {}]
  %s10 = inlined_call_operand.hbm [shape: f32[1,8], index: 10, kind: output, shape index: {}]
  %s11 = sld [smem:[#allocation0]]
  $region113: #{docking_forward.1} parent=0
    _
  %s13 = ssub.s32 1, %s11
  %s14 = scalar_select 0, %s13, %s11
  $region1: #{docking_forward.1} parent=0
    #allocation6 [shape = 'u8[65536]{0}', space=vmem, size = 0x10000, scoped, tag = 'input window, operand 2, single buffered']
    #allocation7 [shape = 's32[2]{0}', space=sflag, size = 0x8, scoped, tag = 'scoped memory for docking_forward.1']
    #allocation8 [shape = 's32[2]{0}', space=sflag, size = 0x8, scoped, tag = 'scoped memory for docking_forward.1']
    #allocation9 [shape = 'u8[262144]{0}', space=vmem, size = 0x40000, scoped, tag = 'input window, operand 4, single buffered']
    #allocation10 [shape = 's32[1]{0}', space=sflag, size = 0x4, scoped, tag = 'scoped memory for docking_forward.1']
    #allocation11 [shape = 'u8[131072]{0}', space=vmem, size = 0x20000, scoped, tag = 'input window, operand 5, single buffered']
    #allocation12 [shape = 'u8[65536]{0}', space=vmem, size = 0x10000, scoped, tag = 'input window, operand 6, single buffered']
    #allocation13 [shape = 's32[1]{0}', space=sflag, size = 0x4, scoped, tag = 'scoped memory for docking_forward.1']
    #allocation14 [shape = 'u8[2560]{0}', space=vmem, size = 0xc00, scoped, tag = 'input window, operand 8, single buffered']
    #allocation15 [shape = 'u8[2048]{0}', space=vmem, size = 0x800, scoped, tag = 'input window, operand 9, single buffered']
    #allocation16 [shape = 's32[1]{0}', space=sflag, size = 0x4, scoped, tag = 'scoped memory for docking_forward.1']
    #allocation17 [shape = 'u8[1024]{0}', space=vmem, size = 0x400, scoped, tag = 'output window, operand 0']
    %15 = vsyncpa [#allocation7], 0
    %16 = vsyncpa [#allocation10], 0
    %17 = vsyncpa [#allocation13], 0
    %18 = vsyncpa [#allocation16], 0
    %19 = vsyncpa [#allocation8], 0
    %s20 = scalar_lea.sflag [#allocation8], 1
    %21 = vsyncpa %s20, 0
    loop: start=0, step=1, limit=5
    $region2: #{docking_forward.1} parent=1 // loop_pre_header
      _
    $region3: #{docking_forward.1} parent=1 // loop_header
      %s23 = sphi 0, %s27
      %p24 = scmp.ge.s32.totalorder %s23, 5
      %s30 = sphi 0, %s42
      %s31 = sphi 0, %s38
      %s32 = sphi 0, %s30
      %s33 = sphi 0, %s31
      %s34 = sphi 0, %s32
      %s35 = sphi 0, %s33
      %s49 = sphi 0, %s51
      %s52 = sphi 0, %s49
      %s53 = sphi 0, %s52
      %s69 = sphi 0, %s53
      %s79 = sphi 0, %s81
      %s82 = sphi 0, %s79
      %s83 = sphi 0, %s82
      %s99 = sphi 0, %s83
      %s103 = sphi 0, %s103
      %s105 = sphi 0, %s103
      %s106 = sphi 0, %s105
      %s120 = sphi 0, %s106
      %s124 = sphi 0, %s124
      %s126 = sphi 0, %s124
      %s127 = sphi 0, %s126
      %s141 = sphi 0, %s127
      %s145 = sphi 0, %s145
      %s147 = sphi 0, %s145
      %s148 = sphi 0, %s147
      %s162 = sphi 0, %s148
      %s166 = sphi 0, %s166
      %s168 = sphi 0, %s166
      %s169 = sphi 0, %s168
      %s183 = sphi 0, %s169
      %s187 = sphi 0, %s187
      %s189 = sphi 0, %s187
      %s190 = sphi 0, %s189
      %s204 = sphi 0, %s190
      %s208 = sphi 0, %s208
      %s210 = sphi 0, %s208
      %s211 = sphi 0, %s210
      %s225 = sphi 0, %s211
      %s229 = sphi 0, %s229
      %s231 = sphi 0, %s229
      %s232 = sphi 0, %s231
      %s246 = sphi 0, %s232
      %s250 = sphi 0, %s250
      %s252 = sphi 0, %s250
      %s253 = sphi 0, %s252
      %s267 = sphi 0, %s253
      %s277 = sphi 0, %s279
      %s280 = sphi 0, %s277
      %s281 = sphi 0, %s280
      %s297 = sphi 0, %s281
    $region4: #{docking_forward.1} parent=1 // loop_header_branch
      %26 = sbr.rel (%p24) target = $region8
    $region5: #{docking_forward.1} parent=1 // loop_body
      %s28 = ssub.s32 %s23, 1
      %s29 = ssub.s32 %s23, 2
      %s36 = sadd.s32 1, %s31
      %p37 = scmp.ge.s32.totalorder %s36, 1
      %s38 = scalar_select %p37, 0, %s36
      %s39 = sadd.s32 1, %s30
      %s40 = scalar_select %p37, %s39, %s30
      %p41 = scmp.ge.s32.totalorder %s40, 3
      %s42 = scalar_select %p41, 0, %s40
      %p43 = scmp.eq.s32.totalorder %s30, 0
      %s44 = scalar_select %p43, %s31, 0
      %p45 = scmp.eq.s32.totalorder %s42, 0
      %s46 = scalar_select %p45, %s38, 0
      %s47 = ssub.s32 %s44, %s46
      %p48 = scmp.eq.s32.totalorder %s47, 0
      %s50 = sadd.s32 %s49, 1
      %s51 = scalar_select %p48, %s49, %s50
      %p54 = pneg %p48
      %p55 = scmp.eq.s32.totalorder %s23, 2
      %p56 = por %p54, %p55
      %p57 = scmp.ne.s32.totalorder %s49, %s52
      %p58 = scmp.eq.s32.totalorder %s23, 0
      %p59 = por %p57, %p58
      %p60 = scmp.ne.s32.totalorder %s49, %s52
      %p61 = scmp.eq.s32.totalorder %s28, 2
      %p62 = por %p60, %p61
      %p63 = scmp.ne.s32.totalorder %s52, %s53
      %p64 = scmp.eq.s32.totalorder %s28, 0
      %p65 = por %p63, %p64
      %p66 = scmp.ne.s32.totalorder %s52, %s53
      %p67 = scmp.eq.s32.totalorder %s29, 2
      %p68 = por %p66, %p67
      %p70 = scmp.ne.s32.totalorder %s53, %s69
      %p71 = scmp.eq.s32.totalorder %s29, 0
      %p72 = por %p70, %p71
      %p73 = scmp.eq.s32.totalorder %s30, 0
      %s74 = scalar_select %p73, %s31, 0
      %p75 = scmp.eq.s32.totalorder %s42, 0
      %s76 = scalar_select %p75, %s38, 0
      %s77 = ssub.s32 %s74, %s76
      %p78 = scmp.eq.s32.totalorder %s77, 0
      %s80 = sadd.s32 %s79, 1
      %s81 = scalar_select %p78, %s79, %s80
      %p84 = pneg %p78
      %p85 = scmp.eq.s32.totalorder %s23, 2
      %p86 = por %p84, %p85
      %p87 = scmp.ne.s32.totalorder %s79, %s82
      %p88 = scmp.eq.s32.totalorder %s23, 0
      %p89 = por %p87, %p88
      %p90 = scmp.ne.s32.totalorder %s79, %s82
      %p91 = scmp.eq.s32.totalorder %s28, 2
      %p92 = por %p90, %p91
      %p93 = scmp.ne.s32.totalorder %s82, %s83
      %p94 = scmp.eq.s32.totalorder %s28, 0
      %p95 = por %p93, %p94
      %p96 = scmp.ne.s32.totalorder %s82, %s83
      %p97 = scmp.eq.s32.totalorder %s29, 2
      %p98 = por %p96, %p97
      %p100 = scmp.ne.s32.totalorder %s83, %s99
      %p101 = scmp.eq.s32.totalorder %s29, 0
      %p102 = por %p100, %p101
      %s104 = sadd.s32 %s103, 1
      %p107 = scmp.eq.s32.totalorder %s23, 2
      %p108 = scmp.ne.s32.totalorder %s103, %s105
      %p109 = scmp.eq.s32.totalorder %s23, 0
      %p110 = por %p108, %p109
      %p111 = scmp.ne.s32.totalorder %s103, %s105
      %p112 = scmp.eq.s32.totalorder %s28, 2
      %p113 = por %p111, %p112
      %p114 = scmp.ne.s32.totalorder %s105, %s106
      %p115 = scmp.eq.s32.totalorder %s28, 0
      %p116 = por %p114, %p115
      %p117 = scmp.ne.s32.totalorder %s105, %s106
      %p118 = scmp.eq.s32.totalorder %s29, 2
      %p119 = por %p117, %p118
      %p121 = scmp.ne.s32.totalorder %s106, %s120
      %p122 = scmp.eq.s32.totalorder %s29, 0
      %p123 = por %p121, %p122
      %s125 = sadd.s32 %s124, 1
      %p128 = scmp.eq.s32.totalorder %s23, 2
      %p129 = scmp.ne.s32.totalorder %s124, %s126
      %p130 = scmp.eq.s32.totalorder %s23, 0
      %p131 = por %p129, %p130
      %p132 = scmp.ne.s32.totalorder %s124, %s126
      %p133 = scmp.eq.s32.totalorder %s28, 2
      %p134 = por %p132, %p133
      %p135 = scmp.ne.s32.totalorder %s126, %s127
      %p136 = scmp.eq.s32.totalorder %s28, 0
      %p137 = por %p135, %p136
      %p138 = scmp.ne.s32.totalorder %s126, %s127
      %p139 = scmp.eq.s32.totalorder %s29, 2
      %p140 = por %p138, %p139
      %p142 = scmp.ne.s32.totalorder %s127, %s141
      %p143 = scmp.eq.s32.totalorder %s29, 0
      %p144 = por %p142, %p143
      %s146 = sadd.s32 %s145, 1
      %p149 = scmp.eq.s32.totalorder %s23, 2
      %p150 = scmp.ne.s32.totalorder %s145, %s147
      %p151 = scmp.eq.s32.totalorder %s23, 0
      %p152 = por %p150, %p151
      %p153 = scmp.ne.s32.totalorder %s145, %s147
      %p154 = scmp.eq.s32.totalorder %s28, 2
      %p155 = por %p153, %p154
      %p156 = scmp.ne.s32.totalorder %s147, %s148
      %p157 = scmp.eq.s32.totalorder %s28, 0
      %p158 = por %p156, %p157
      %p159 = scmp.ne.s32.totalorder %s147, %s148
      %p160 = scmp.eq.s32.totalorder %s29, 2
      %p161 = por %p159, %p160
      %p163 = scmp.ne.s32.totalorder %s148, %s162
      %p164 = scmp.eq.s32.totalorder %s29, 0
      %p165 = por %p163, %p164
      %s167 = sadd.s32 %s166, 1
      %p170 = scmp.eq.s32.totalorder %s23, 2
      %p171 = scmp.ne.s32.totalorder %s166, %s168
      %p172 = scmp.eq.s32.totalorder %s23, 0
      %p173 = por %p171, %p172
      %p174 = scmp.ne.s32.totalorder %s166, %s168
      %p175 = scmp.eq.s32.totalorder %s28, 2
      %p176 = por %p174, %p175
      %p177 = scmp.ne.s32.totalorder %s168, %s169
      %p178 = scmp.eq.s32.totalorder %s28, 0
      %p179 = por %p177, %p178
      %p180 = scmp.ne.s32.totalorder %s168, %s169
      %p181 = scmp.eq.s32.totalorder %s29, 2
      %p182 = por %p180, %p181
      %p184 = scmp.ne.s32.totalorder %s169, %s183
      %p185 = scmp.eq.s32.totalorder %s29, 0
      %p186 = por %p184, %p185
      %s188 = sadd.s32 %s187, 1
      %p191 = scmp.eq.s32.totalorder %s23, 2
      %p192 = scmp.ne.s32.totalorder %s187, %s189
      %p193 = scmp.eq.s32.totalorder %s23, 0
      %p194 = por %p192, %p193
      %p195 = scmp.ne.s32.totalorder %s187, %s189
      %p196 = scmp.eq.s32.totalorder %s28, 2
      %p197 = por %p195, %p196
      %p198 = scmp.ne.s32.totalorder %s189, %s190
      %p199 = scmp.eq.s32.totalorder %s28, 0
      %p200 = por %p198, %p199
      %p201 = scmp.ne.s32.totalorder %s189, %s190
      %p202 = scmp.eq.s32.totalorder %s29, 2
      %p203 = por %p201, %p202
      %p205 = scmp.ne.s32.totalorder %s190, %s204
      %p206 = scmp.eq.s32.totalorder %s29, 0
      %p207 = por %p205, %p206
      %s209 = sadd.s32 %s208, 1
      %p212 = scmp.eq.s32.totalorder %s23, 2
      %p213 = scmp.ne.s32.totalorder %s208, %s210
      %p214 = scmp.eq.s32.totalorder %s23, 0
      %p215 = por %p213, %p214
      %p216 = scmp.ne.s32.totalorder %s208, %s210
      %p217 = scmp.eq.s32.totalorder %s28, 2
      %p218 = por %p216, %p217
      %p219 = scmp.ne.s32.totalorder %s210, %s211
      %p220 = scmp.eq.s32.totalorder %s28, 0
      %p221 = por %p219, %p220
      %p222 = scmp.ne.s32.totalorder %s210, %s211
      %p223 = scmp.eq.s32.totalorder %s29, 2
      %p224 = por %p222, %p223
      %p226 = scmp.ne.s32.totalorder %s211, %s225
      %p227 = scmp.eq.s32.totalorder %s29, 0
      %p228 = por %p226, %p227
      %s230 = sadd.s32 %s229, 1
      %p233 = scmp.eq.s32.totalorder %s23, 2
      %p234 = scmp.ne.s32.totalorder %s229, %s231
      %p235 = scmp.eq.s32.totalorder %s23, 0
      %p236 = por %p234, %p235
      %p237 = scmp.ne.s32.totalorder %s229, %s231
      %p238 = scmp.eq.s32.totalorder %s28, 2
      %p239 = por %p237, %p238
      %p240 = scmp.ne.s32.totalorder %s231, %s232
      %p241 = scmp.eq.s32.totalorder %s28, 0
      %p242 = por %p240, %p241
      %p243 = scmp.ne.s32.totalorder %s231, %s232
      %p244 = scmp.eq.s32.totalorder %s29, 2
      %p245 = por %p243, %p244
      %p247 = scmp.ne.s32.totalorder %s232, %s246
      %p248 = scmp.eq.s32.totalorder %s29, 0
      %p249 = por %p247, %p248
      %s251 = sadd.s32 %s250, 1
      %p254 = scmp.eq.s32.totalorder %s23, 2
      %p255 = scmp.ne.s32.totalorder %s250, %s252
      %p256 = scmp.eq.s32.totalorder %s23, 0
      %p257 = por %p255, %p256
      %p258 = scmp.ne.s32.totalorder %s250, %s252
      %p259 = scmp.eq.s32.totalorder %s28, 2
      %p260 = por %p258, %p259
      %p261 = scmp.ne.s32.totalorder %s252, %s253
      %p262 = scmp.eq.s32.totalorder %s28, 0
      %p263 = por %p261, %p262
      %p264 = scmp.ne.s32.totalorder %s252, %s253
      %p265 = scmp.eq.s32.totalorder %s29, 2
      %p266 = por %p264, %p265
      %p268 = scmp.ne.s32.totalorder %s253, %s267
      %p269 = scmp.eq.s32.totalorder %s29, 0
      %p270 = por %p268, %p269
      %p271 = scmp.eq.s32.totalorder %s30, 2
      %s272 = scalar_select %p271, %s31, 0
      %p273 = scmp.eq.s32.totalorder %s42, 2
      %s274 = scalar_select %p273, %s38, 0
      %s275 = ssub.s32 %s272, %s274
      %p276 = scmp.eq.s32.totalorder %s275, 0
      %s278 = sadd.s32 %s277, 1
      %s279 = scalar_select %p276, %s277, %s278
      %p282 = pneg %p276
      %p283 = scmp.eq.s32.totalorder %s23, 2
      %p284 = por %p282, %p283
      %p285 = scmp.ne.s32.totalorder %s277, %s280
      %p286 = scmp.eq.s32.totalorder %s23, 0
      %p287 = por %p285, %p286
      %p288 = scmp.ne.s32.totalorder %s277, %s280
      %p289 = scmp.eq.s32.totalorder %s28, 2
      %p290 = por %p288, %p289
      %p291 = scmp.ne.s32.totalorder %s280, %s281
      %p292 = scmp.eq.s32.totalorder %s28, 0
      %p293 = por %p291, %p292
      %p294 = scmp.ne.s32.totalorder %s280, %s281
      %p295 = scmp.eq.s32.totalorder %s29, 2
      %p296 = por %p294, %p295
      %p298 = scmp.ne.s32.totalorder %s281, %s297
      %p299 = scmp.eq.s32.totalorder %s29, 0
      %p300 = por %p298, %p299
      %p301 = scmp.le.s32.totalorder 1, %s23
      %p302 = scmp.lt.s32.totalorder %s23, 4
      %p303 = pnand %p301, %p302
      %p304 = pneg %p303
      // Predicated region
      $region9: #{docking_forward.1} parent=5 // pred_check
        _
      $region10: #{docking_forward.1} parent=5 // pred_check_branch
        %306 = sbr.rel (%p303) target = $region12
      $region11: #{docking_forward.1} parent=5 // pred_region
        %s307 = ssub.s32 %s23, 1
        // Predicated region
        $region13: #{docking_forward.1} parent=11 // pred_check
          %p308 = pneg %p116
        $region14: #{docking_forward.1} parent=11 // pred_check_branch
          %310 = sbr.rel (%p308) target = $region16
        $region15: #{docking_forward.1} parent=11 // pred_region
          %s312 = ssub.s32 2048, 2048
          %313 = vsyncadd [#allocation7], %s312
          %s314 = sshll.u32 [#allocation6], 4
          %s315 = int_to_ptr.vmem [resolvable:$true] %s314
          %320 = dma.hbm_to_vmem [thread:$0]  %s2, 2048, %s315, [#allocation7], 256, 256, 16
        $region16: #{docking_forward.1} parent=11 // pred_fallthru
          _
        // Predicated region
        $region17: #{docking_forward.1} parent=11 // pred_check
          %p321 = pneg %p137
        $region18: #{docking_forward.1} parent=11 // pred_check_branch
          %323 = sbr.rel (%p321) target = $region20
        $region19: #{docking_forward.1} parent=11 // pred_region
          _
        $region20: #{docking_forward.1} parent=11 // pred_fallthru
          _
        // Predicated region
        $region21: #{docking_forward.1} parent=11 // pred_check
          %p324 = pneg %p158
        $region22: #{docking_forward.1} parent=11 // pred_check_branch
          %326 = sbr.rel (%p324) target = $region24
        $region23: #{docking_forward.1} parent=11 // pred_region
          %s328 = ssub.s32 8192, 8192
          %329 = vsyncadd [#allocation10], %s328
          %s330 = sshll.u32 [#allocation9], 4
          %s331 = int_to_ptr.vmem [resolvable:$true] %s330
          %336 = dma.hbm_to_vmem [thread:$0]  %s4, 8192, %s331, [#allocation10], 128, 128, 8
        $region24: #{docking_forward.1} parent=11 // pred_fallthru
          _
        // Predicated region
        $region25: #{docking_forward.1} parent=11 // pred_check
          %p337 = pneg %p179
        $region26: #{docking_forward.1} parent=11 // pred_check_branch
          %339 = sbr.rel (%p337) target = $region28
        $region27: #{docking_forward.1} parent=11 // pred_region
          %s341 = ssub.s32 4096, 4096
          %342 = vsyncadd [#allocation10], %s341
          %s343 = sshll.u32 [#allocation11], 4
          %s344 = int_to_ptr.vmem [resolvable:$true] %s343
          %349 = dma.hbm_to_vmem [thread:$0]  %s5, 4096, %s344, [#allocation10], 128, 128, 8
        $region28: #{docking_forward.1} parent=11 // pred_fallthru
          _
        // Predicated region
        $region29: #{docking_forward.1} parent=11 // pred_check
          %p350 = pneg %p200
        $region30: #{docking_forward.1} parent=11 // pred_check_branch
          %352 = sbr.rel (%p350) target = $region32
        $region31: #{docking_forward.1} parent=11 // pred_region
          %s354 = ssub.s32 2048, 2048
          %355 = vsyncadd [#allocation13], %s354
          %s356 = sshll.u32 [#allocation12], 4
          %s357 = int_to_ptr.vmem [resolvable:$true] %s356
          %362 = dma.hbm_to_vmem [thread:$0]  %s6, 2048, %s357, [#allocation13], 64, 64, 4
        $region32: #{docking_forward.1} parent=11 // pred_fallthru
          _
        // Predicated region
        $region33: #{docking_forward.1} parent=11 // pred_check
          %p363 = pneg %p221
        $region34: #{docking_forward.1} parent=11 // pred_check_branch
          %365 = sbr.rel (%p363) target = $region36
        $region35: #{docking_forward.1} parent=11 // pred_region
          _
        $region36: #{docking_forward.1} parent=11 // pred_fallthru
          _
        // Predicated region
        $region37: #{docking_forward.1} parent=11 // pred_check
          %p366 = pneg %p242
        $region38: #{docking_forward.1} parent=11 // pred_check_branch
          %368 = sbr.rel (%p366) target = $region40
        $region39: #{docking_forward.1} parent=11 // pred_region
          %s370 = ssub.s32 80, 80
          %371 = vsyncadd [#allocation13], %s370
          %s373 = sshll.u32 [#allocation14], 4
          %s374 = int_to_ptr.vmem [resolvable:$true] %s373
          %376 = dma.hbm_to_vmem [thread:$0]  %s8, 80, %s374, [#allocation13]
        $region40: #{docking_forward.1} parent=11 // pred_fallthru
          _
        // Predicated region
        $region41: #{docking_forward.1} parent=11 // pred_check
          %p377 = pneg %p263
        $region42: #{docking_forward.1} parent=11 // pred_check_branch
          %379 = sbr.rel (%p377) target = $region44
        $region43: #{docking_forward.1} parent=11 // pred_region
          %s381 = ssub.s32 64, 64
          %382 = vsyncadd [#allocation16], %s381
          %s384 = sshll.u32 [#allocation15], 4
          %s385 = int_to_ptr.vmem [resolvable:$true] %s384
          %387 = dma.hbm_to_vmem [thread:$0]  %s9, 64, %s385, [#allocation16]
        $region44: #{docking_forward.1} parent=11 // pred_fallthru
          _
      $region12: #{docking_forward.1} parent=5 // pred_fallthru
        _
      %p388 = scmp.lt.s32.totalorder %s23, 3
      // Predicated region
      $region45: #{docking_forward.1} parent=5 // pred_check
        %p389 = pneg %p388
      $region46: #{docking_forward.1} parent=5 // pred_check_branch
        %391 = sbr.rel (%p389) target = $region48
      $region47: #{docking_forward.1} parent=5 // pred_region
        // Predicated region
        $region49: #{docking_forward.1} parent=47 // pred_check
          %p392 = pneg %p59
        $region50: #{docking_forward.1} parent=47 // pred_check_branch
          %394 = sbr.rel (%p392) target = $region52
        $region51: #{docking_forward.1} parent=47 // pred_region
          %p395 = scmp.eq.s32.totalorder %s30, 0
          %s396 = scalar_select %p395, %s31, 0
          %p397 = scmp.lt.s32.totalorder %s396, 0
          %s398 = scalar_select %p397, %s396, 0
          %s399 = smul.addr %s398, 4
          %s400 = scalar_lea.vmem %s0, %s399
          %p401 = scmp.eq.s32.totalorder %s30, 0
          %s402 = scalar_select %p401, %s31, 0
        $region52: #{docking_forward.1} parent=47 // pred_fallthru
          _
        // Predicated region
        $region53: #{docking_forward.1} parent=47 // pred_check
          %p403 = pneg %p89
        $region54: #{docking_forward.1} parent=47 // pred_check_branch
          %405 = sbr.rel (%p403) target = $region56
        $region55: #{docking_forward.1} parent=47 // pred_region
          %p406 = scmp.eq.s32.totalorder %s30, 0
          %s407 = scalar_select %p406, %s31, 0
          %p408 = scmp.lt.s32.totalorder %s407, 0
          %s409 = scalar_select %p408, %s407, 0
          %s410 = smul.addr %s409, 4
          %s411 = scalar_lea.vmem %s1, %s410
          %p412 = scmp.eq.s32.totalorder %s30, 0
          %s413 = scalar_select %p412, %s31, 0
        $region56: #{docking_forward.1} parent=47 // pred_fallthru
          _
      $region48: #{docking_forward.1} parent=5 // pred_fallthru
        _
      %p414 = scmp.le.s32.totalorder 1, %s23
      %p415 = scmp.lt.s32.totalorder %s23, 4
      %p416 = pnand %p414, %p415
      %p417 = pneg %p416
      // Predicated region
      $region57: #{docking_forward.1} parent=5 // pred_check
        _
      $region58: #{docking_forward.1} parent=5 // pred_check_branch
        %419 = sbr.rel (%p416) target = $region60
      $region59: #{docking_forward.1} parent=5 // pred_region
        %s420 = ssub.s32 %s23, 1
        // Predicated region
        $region61: #{docking_forward.1} parent=59 // pred_check
          %p421 = pneg %p116
        $region62: #{docking_forward.1} parent=59 // pred_check_branch
          %423 = sbr.rel (%p421) target = $region64
        $region63: #{docking_forward.1} parent=59 // pred_region
          %424 = dma.done [#allocation7], 2048
        $region64: #{docking_forward.1} parent=59 // pred_fallthru
          _
        // Predicated region
        $region65: #{docking_forward.1} parent=59 // pred_check
          %p425 = pneg %p158
        $region66: #{docking_forward.1} parent=59 // pred_check_branch
          %427 = sbr.rel (%p425) target = $region68
        $region67: #{docking_forward.1} parent=59 // pred_region
          %428 = dma.done [#allocation10], 8192
        $region68: #{docking_forward.1} parent=59 // pred_fallthru
          _
        // Predicated region
        $region69: #{docking_forward.1} parent=59 // pred_check
          %p429 = pneg %p179
        $region70: #{docking_forward.1} parent=59 // pred_check_branch
          %431 = sbr.rel (%p429) target = $region72
        $region71: #{docking_forward.1} parent=59 // pred_region
          %432 = dma.done [#allocation10], 4096
        $region72: #{docking_forward.1} parent=59 // pred_fallthru
          _
        // Predicated region
        $region73: #{docking_forward.1} parent=59 // pred_check
          %p433 = pneg %p200
        $region74: #{docking_forward.1} parent=59 // pred_check_branch
          %435 = sbr.rel (%p433) target = $region76
        $region75: #{docking_forward.1} parent=59 // pred_region
          %436 = dma.done [#allocation13], 2048
        $region76: #{docking_forward.1} parent=59 // pred_fallthru
          _
        // Predicated region
        $region77: #{docking_forward.1} parent=59 // pred_check
          %p437 = pneg %p242
        $region78: #{docking_forward.1} parent=59 // pred_check_branch
          %439 = sbr.rel (%p437) target = $region80
        $region79: #{docking_forward.1} parent=59 // pred_region
          %440 = dma.done [#allocation13], 80
        $region80: #{docking_forward.1} parent=59 // pred_fallthru
          _
        // Predicated region
        $region81: #{docking_forward.1} parent=59 // pred_check
          %p441 = pneg %p263
        $region82: #{docking_forward.1} parent=59 // pred_check_branch
          %443 = sbr.rel (%p441) target = $region84
        $region83: #{docking_forward.1} parent=59 // pred_region
          %444 = dma.done [#allocation16], 64
        $region84: #{docking_forward.1} parent=59 // pred_fallthru
          _
        %p445 = scmp.eq.s32.totalorder %s32, 0
        %s446 = scalar_select %p445, %s33, 0
        %p447 = scmp.lt.s32.totalorder %s446, 0
        %s448 = scalar_select %p447, %s446, 0
        %s449 = smul.addr %s448, 4
        %s450 = scalar_lea.vmem %s0, %s449
        %p451 = pneg %p65
        %p452 = pneg %p62
        %p453 = scmp.eq.s32.totalorder %s32, 0
        %s454 = scalar_select %p453, %s33, 0
        %p455 = scmp.lt.s32.totalorder %s454, 0
        %s456 = scalar_select %p455, %s454, 0
        %s457 = smul.addr %s456, 4
        %s458 = scalar_lea.vmem %s1, %s457
        %p459 = pneg %p95
        %p460 = pneg %p92
        %p461 = pneg %p116
        %p462 = pneg %p113
        %p463 = pneg %p137
        %p464 = pneg %p134
        %p465 = pneg %p158
        %p466 = pneg %p155
        %p467 = pneg %p179
        %p468 = pneg %p176
        %p469 = pneg %p200
        %p470 = pneg %p197
        %p471 = pneg %p221
        %p472 = pneg %p218
        %p473 = pneg %p242
        %p474 = pneg %p239
        %p475 = pneg %p263
        %p476 = pneg %p260
        %p477 = pneg %p293
        %p478 = pneg %p290
        %s479 = sand.u32 %s280, 1
        %s480 = scalar_lea.sflag [#allocation8], %s479
        %s481 = sand.u32 %s280, 1
        %s482 = scalar_lea.vmem [#allocation17], %s481
        %p483 = scmp.eq.s32.totalorder %s32, 0
        %s484 = scalar_select %p483, %s33, 0
        %p485 = scmp.lt.s32.totalorder %s484, 0
        %s486 = scalar_select %p485, %s484, 0
        %s487 = smul.addr %s486, 4
        %s488 = scalar_lea.vmem %s0, %s487
        %p489 = scmp.eq.s32.totalorder %s32, 0
        %s490 = scalar_select %p489, %s33, 0
        %p491 = scmp.eq.s32.totalorder %s32, 0
        %s492 = scalar_select %p491, %s33, 0
        %p493 = scmp.lt.s32.totalorder %s492, 0
        %s494 = scalar_select %p493, %s492, 0
        %s495 = smul.addr %s494, 4
        %s496 = scalar_lea.vmem %s1, %s495
        %p497 = scmp.eq.s32.totalorder %s32, 0
        %s498 = scalar_select %p497, %s33, 0
        %p499 = scmp.eq.s32.totalorder %s32, 2
        %s500 = scalar_select %p499, %s33, 0
        %s502 = smul.u32 %s33, 8
        %p503 = scmp.eq.s32.totalorder %s32, 0
        // Predicated region
        $region85: #{docking_forward.1} parent=59 // pred_check
          %p504 = pneg %p503
        $region86: #{docking_forward.1} parent=59 // pred_check_branch
          %506 = sbr.rel (%p504) target = $region88
        $region87: #{docking_forward.1} parent=59 // pred_region
          %p507 = scmp.eq.s32.totalorder %s33, 0
          // Predicated region
          $region89: #{docking_forward.1} parent=87 // pred_check
            %p508 = pneg %p507
          $region90: #{docking_forward.1} parent=87 // pred_check_branch
            %510 = sbr.rel (%p508) target = $region92
          $region91: #{docking_forward.1} parent=87 // pred_region
            %511 = vst [vmem:[#allocation4] sm:$0xf] 0.0
            %512 = vst [vmem:[#allocation5] sm:$0x3] 0.0
          $region92: #{docking_forward.1} parent=87 // pred_fallthru
            _
          %v513 = vld [vmem:[%s7] sm:$0xf]
          %v514 = vld [vmem:[%s7 + $0x4] sm:$0x3]
          %v515 = vld [vmem:[%s7 + $0x6] sm:$0x3]
          %v516 = vld [vmem:[%s488] sm:$0xf]
          %v517 = vld [vmem:[#allocation6] sm:$0xff]
          %v518 = vld [vmem:[#allocation6 + $0x8] sm:$0xff]
          %v519 = vld [vmem:[#allocation6 + $0x10] sm:$0xff]
          %v520 = vld [vmem:[#allocation6 + $0x18] sm:$0xff]
          %v521 = vld [vmem:[#allocation6 + $0x20] sm:$0xff]
          %v522 = vld [vmem:[#allocation6 + $0x28] sm:$0xff]
          %v523 = vld [vmem:[#allocation6 + $0x30] sm:$0xff]
          %v524 = vld [vmem:[#allocation6 + $0x38] sm:$0xff]
          %v525 = vld [vmem:[#allocation6 + $0x40] sm:$0xff]
          %v526 = vld [vmem:[#allocation6 + $0x48] sm:$0xff]
          %v527 = vld [vmem:[#allocation6 + $0x50] sm:$0xff]
          %v528 = vld [vmem:[#allocation6 + $0x58] sm:$0xff]
          %v529 = vld [vmem:[#allocation6 + $0x60] sm:$0xff]
          %v530 = vld [vmem:[#allocation6 + $0x68] sm:$0xff]
          %v531 = vld [vmem:[#allocation6 + $0x70] sm:$0xff]
          %v532 = vld [vmem:[#allocation6 + $0x78] sm:$0xff]
          %v534 = vlaneseq
          %v535 = vshrl.u32 %v534, 7
          %v536 = vsub.s32 0, %v535
          %v537 = vrot.slane %v513, %v536
          %v538 = vlaneseq
          %v539 = vshrl.u32 %v538, 7
          %v540 = vsub.s32 1, %v539
          %v541 = vrot.slane %v513, %v540
          %v542 = vlaneseq
          %v543 = vshrl.u32 %v542, 7
          %v544 = vsub.s32 2, %v543
          %v545 = vrot.slane %v513, %v544
          %v546 = vlaneseq
          %v547 = vshrl.u32 %v546, 7
          %v548 = vsub.s32 3, %v547
          %v549 = vrot.slane %v513, %v548
          %v570 = vunpack.c.l.b16 %v517
          %v571 = vunpack.c.h.b16 %v517
          %v572 = vunpack.c.l.b16 %v518
          %v573 = vunpack.c.h.b16 %v518
          %v574 = vunpack.c.l.b16 %v519
          %v575 = vunpack.c.h.b16 %v519
          %v576 = vunpack.c.l.b16 %v520
          %v577 = vunpack.c.h.b16 %v520
          %v578 = vunpack.c.l.b16 %v521
          %v579 = vunpack.c.h.b16 %v521
          %v580 = vunpack.c.l.b16 %v522
          %v581 = vunpack.c.h.b16 %v522
          %v582 = vunpack.c.l.b16 %v523
          %v583 = vunpack.c.h.b16 %v523
          %v584 = vunpack.c.l.b16 %v524
          %v585 = vunpack.c.h.b16 %v524
          %v586 = vunpack.c.l.b16 %v525
          %v587 = vunpack.c.h.b16 %v525
          %v588 = vunpack.c.l.b16 %v526
          %v589 = vunpack.c.h.b16 %v526
          %v590 = vunpack.c.l.b16 %v527
          %v591 = vunpack.c.h.b16 %v527
          %v592 = vunpack.c.l.b16 %v528
          %v593 = vunpack.c.h.b16 %v528
          %v594 = vunpack.c.l.b16 %v529
          %v595 = vunpack.c.h.b16 %v529
          %v596 = vunpack.c.l.b16 %v530
          %v597 = vunpack.c.h.b16 %v530
          %v598 = vunpack.c.l.b16 %v531
          %v599 = vunpack.c.h.b16 %v531
          %v600 = vunpack.c.l.b16 %v532
          %v601 = vunpack.c.h.b16 %v532
          %v602 = vpack.c.b16 %v574, %v570
          %v603 = vpack.c.b16 %v575, %v571
          %v604 = vpack.c.b16 %v576, %v572
          %v605 = vpack.c.b16 %v577, %v573
          %v606 = vpack.c.b16 %v582, %v578
          %v607 = vpack.c.b16 %v583, %v579
          %v608 = vpack.c.b16 %v584, %v580
          %v609 = vpack.c.b16 %v585, %v581
          %v610 = vpack.c.b16 %v590, %v586
          %v611 = vpack.c.b16 %v591, %v587
          %v612 = vpack.c.b16 %v592, %v588
          %v613 = vpack.c.b16 %v593, %v589
          %v614 = vpack.c.b16 %v598, %v594
          %v615 = vpack.c.b16 %v599, %v595
          %v616 = vpack.c.b16 %v600, %v596
          %v617 = vpack.c.b16 %v601, %v597
          %vm634 = vcmask 523264
          %v636 = vsel %vm634, %v516, 0
          %638 = vmatprep.subr.bf16.mxu0 0
          %639 = vmatpush1.bf16.msra.mxu0 0
          %640 = vmatprep.subr.bf16.mxu0 0
          %641 = vmatpush1.bf16.msra.mxu0 0
          %642 = vmatprep.subr.bf16.mxu0 0
          %643 = vmatpush1.bf16.msra.mxu0 0
          %644 = vmatprep.subr.bf16.mxu0 0
          %645 = vmatpush1.bf16.msra.mxu0 0
          %646 = vmatprep.subr.bf16.mxu0 %v615
          %647 = vmatpush1.bf16.msra.mxu0 %v614
          %648 = vmatprep.subr.bf16.mxu0 %v611
          %649 = vmatpush1.bf16.msra.mxu0 %v610
          %650 = vmatprep.subr.bf16.mxu0 %v607
          %651 = vmatpush1.bf16.msra.mxu0 %v606
          %652 = vmatprep.subr.bf16.mxu0 %v603
          %653 = vmatpush1.bf16.msra.mxu0 %v602
          %654 = vmatprep.subr.bf16.mxu0 0
          %655 = vmatpush2.bf16.msra.mxu0 0
          %656 = vmatprep.subr.bf16.mxu0 0
          %657 = vmatpush2.bf16.msra.mxu0 0
          %658 = vmatprep.subr.bf16.mxu0 0
          %659 = vmatpush2.bf16.msra.mxu0 0
          %660 = vmatprep.subr.bf16.mxu0 0
          %661 = vmatpush2.bf16.msra.mxu0 0
          %662 = vmatprep.subr.bf16.mxu0 0
          %663 = vmatpush2.bf16.msra.mxu0 0
          %664 = vmatprep.subr.bf16.mxu0 0
          %665 = vmatpush2.bf16.msra.mxu0 0
          %666 = vmatprep.subr.bf16.mxu0 0
          %667 = vmatpush2.bf16.msra.mxu0 0
          %668 = vmatprep.subr.bf16.mxu0 0
          %669 = vmatpush2.bf16.msra.mxu0 0
          %670 = vmatprep.mubr.bf16.mxu0 0
          %671 = vmatmul.mubr.bf16.gmra.mxu0 %v636
          %v672 = vpop.f32.mrf.mxu0
          %v673 = vadd.f32 %v537, %v672
          %v674 = vpop.f32.mrf.mxu0
          %v675 = vadd.f32 %v541, %v674
          %v676 = vpop.f32.mrf.mxu0
          %v677 = vpop.f32.mrf.mxu0
          %678 = vdwg.mxu0
          %679 = vmatprep.subr.bf16.mxu0 0
          %680 = vmatpush1.bf16.msra.mxu0 0
          %681 = vmatprep.subr.bf16.mxu0 0
          %682 = vmatpush1.bf16.msra.mxu0 0
          %683 = vmatprep.subr.bf16.mxu0 0
          %684 = vmatpush1.bf16.msra.mxu0 0
          %685 = vmatprep.subr.bf16.mxu0 0
          %686 = vmatpush1.bf16.msra.mxu0 0
          %687 = vmatprep.subr.bf16.mxu0 %v617
          %688 = vmatpush1.bf16.msra.mxu0 %v616
          %689 = vmatprep.subr.bf16.mxu0 %v613
          %690 = vmatpush1.bf16.msra.mxu0 %v612
          %691 = vmatprep.subr.bf16.mxu0 %v609
          %692 = vmatpush1.bf16.msra.mxu0 %v608
          %693 = vmatprep.subr.bf16.mxu0 %v605
          %694 = vmatpush1.bf16.msra.mxu0 %v604
          %695 = vmatprep.subr.bf16.mxu0 0
          %696 = vmatpush2.bf16.msra.mxu0 0
          %697 = vmatprep.subr.bf16.mxu0 0
          %698 = vmatpush2.bf16.msra.mxu0 0
          %699 = vmatprep.subr.bf16.mxu0 0
          %700 = vmatpush2.bf16.msra.mxu0 0
          %701 = vmatprep.subr.bf16.mxu0 0
          %702 = vmatpush2.bf16.msra.mxu0 0
          %703 = vmatprep.subr.bf16.mxu0 0
          %704 = vmatpush2.bf16.msra.mxu0 0
          %705 = vmatprep.subr.bf16.mxu0 0
          %706 = vmatpush2.bf16.msra.mxu0 0
          %707 = vmatprep.subr.bf16.mxu0 0
          %708 = vmatpush2.bf16.msra.mxu0 0
          %709 = vmatprep.subr.bf16.mxu0 0
          %710 = vmatpush2.bf16.msra.mxu0 0
          %711 = vmatprep.mubr.bf16.mxu0 0
          %712 = vmatmul.mubr.bf16.gmra.mxu0 %v636
          %v713 = vpop.f32.mrf.mxu0
          %v714 = vadd.f32 %v545, %v713
          %v715 = vpop.f32.mrf.mxu0
          %v716 = vadd.f32 %v549, %v715
          %v717 = vpop.f32.mrf.mxu0
          %v718 = vpop.f32.mrf.mxu0
          %719 = vdwg.mxu0
          %v720 = vld [vmem:[%s496] sm:$0xf]
          %v721 = vld [vmem:[%s3] sm:$0xff]
          %v722 = vld [vmem:[%s3 + $0x8] sm:$0xff]
          %v723 = vld [vmem:[%s3 + $0x10] sm:$0xff]
          %v724 = vld [vmem:[%s3 + $0x18] sm:$0xff]
          %v726 = vlaneseq
          %v727 = vshrl.u32 %v726, 7
          %v728 = vsub.s32 0, %v727
          %v729 = vrot.slane %v514, %v728
          %v730 = vlaneseq
          %v731 = vshrl.u32 %v730, 7
          %v732 = vsub.s32 1, %v731
          %v733 = vrot.slane %v514, %v732
          %v740 = vunpack.c.l.b16 %v721
          %v741 = vunpack.c.h.b16 %v721
          %v742 = vunpack.c.l.b16 %v722
          %v743 = vunpack.c.h.b16 %v722
          %v744 = vunpack.c.l.b16 %v723
          %v745 = vunpack.c.h.b16 %v723
          %v746 = vunpack.c.l.b16 %v724
          %v747 = vunpack.c.h.b16 %v724
          %v748 = vpack.c.b16 %v742, %v740
          %v749 = vpack.c.b16 %v743, %v741
          %v750 = vpack.c.b16 %v746, %v744
          %v751 = vpack.c.b16 %v747, %v745
          %vm756 = vcmask 261120
          %v758 = vsel %vm756, %v720, 0
          %760 = vmatprep.subr.bf16.mxu0 0
          %761 = vmatpush1.bf16.msra.mxu0 0
          %762 = vmatprep.subr.bf16.mxu0 0
          %763 = vmatpush1.bf16.msra.mxu0 0
          %764 = vmatprep.subr.bf16.mxu0 0
          %765 = vmatpush1.bf16.msra.mxu0 0
          %766 = vmatprep.subr.bf16.mxu0 0
          %767 = vmatpush1.bf16.msra.mxu0 0
          %768 = vmatprep.subr.bf16.mxu0 0
          %769 = vmatpush1.bf16.msra.mxu0 0
          %770 = vmatprep.subr.bf16.mxu0 0
          %771 = vmatpush1.bf16.msra.mxu0 0
          %772 = vmatprep.subr.bf16.mxu0 %v751
          %773 = vmatpush1.bf16.msra.mxu0 %v750
          %774 = vmatprep.subr.bf16.mxu0 %v749
          %775 = vmatpush1.bf16.msra.mxu0 %v748
          %776 = vmatprep.subr.bf16.mxu0 0
          %777 = vmatpush2.bf16.msra.mxu0 0
          %778 = vmatprep.subr.bf16.mxu0 0
          %779 = vmatpush2.bf16.msra.mxu0 0
          %780 = vmatprep.subr.bf16.mxu0 0
          %781 = vmatpush2.bf16.msra.mxu0 0
          %782 = vmatprep.subr.bf16.mxu0 0
          %783 = vmatpush2.bf16.msra.mxu0 0
          %784 = vmatprep.subr.bf16.mxu0 0
          %785 = vmatpush2.bf16.msra.mxu0 0
          %786 = vmatprep.subr.bf16.mxu0 0
          %787 = vmatpush2.bf16.msra.mxu0 0
          %788 = vmatprep.subr.bf16.mxu0 0
          %789 = vmatpush2.bf16.msra.mxu0 0
          %790 = vmatprep.subr.bf16.mxu0 0
          %791 = vmatpush2.bf16.msra.mxu0 0
          %792 = vmatprep.mubr.bf16.mxu0 0
          %793 = vmatmul.mubr.bf16.gmra.mxu0 %v758
          %v794 = vpop.f32.mrf.mxu0
          %v795 = vadd.f32 %v729, %v794
          %v796 = vpop.f32.mrf.mxu0
          %v797 = vadd.f32 %v733, %v796
          %v798 = vpop.f32.mrf.mxu0
          %v799 = vpop.f32.mrf.mxu0
          %800 = vdwg.mxu0
          %v801 = vpack.c.bf16 %v673, %v673
          %v802 = vpack.c.bf16 %v675, %v675
          %v803 = vpack.c.bf16 %v714, %v714
          %v804 = vpack.c.bf16 %v716, %v716
          %v805 = vld [vmem:[#allocation9] sm:$0xff]
          %v806 = vld [vmem:[#allocation9 + $0x8] sm:$0xff]
          %v807 = vld [vmem:[#allocation9 + $0x10] sm:$0xff]
          %v808 = vld [vmem:[#allocation9 + $0x18] sm:$0xff]
          %v809 = vld [vmem:[#allocation9 + $0x20] sm:$0xff]
          %v810 = vld [vmem:[#allocation9 + $0x28] sm:$0xff]
          %v811 = vld [vmem:[#allocation9 + $0x30] sm:$0xff]
          %v812 = vld [vmem:[#allocation9 + $0x38] sm:$0xff]
          %v813 = vld [vmem:[#allocation9 + $0x40] sm:$0xff]
          %v814 = vld [vmem:[#allocation9 + $0x48] sm:$0xff]
          %v815 = vld [vmem:[#allocation9 + $0x50] sm:$0xff]
          %v816 = vld [vmem:[#allocation9 + $0x58] sm:$0xff]
          %v817 = vld [vmem:[#allocation9 + $0x60] sm:$0xff]
          %v818 = vld [vmem:[#allocation9 + $0x68] sm:$0xff]
          %v819 = vld [vmem:[#allocation9 + $0x70] sm:$0xff]
          %v820 = vld [vmem:[#allocation9 + $0x78] sm:$0xff]
          %v821 = vld [vmem:[#allocation9 + $0x80] sm:$0xff]
          %v822 = vld [vmem:[#allocation9 + $0x88] sm:$0xff]
          %v823 = vld [vmem:[#allocation9 + $0x90] sm:$0xff]
          %v824 = vld [vmem:[#allocation9 + $0x98] sm:$0xff]
          %v825 = vld [vmem:[#allocation9 + $0xa0] sm:$0xff]
          %v826 = vld [vmem:[#allocation9 + $0xa8] sm:$0xff]
          %v827 = vld [vmem:[#allocation9 + $0xb0] sm:$0xff]
          %v828 = vld [vmem:[#allocation9 + $0xb8] sm:$0xff]
          %v829 = vld [vmem:[#allocation9 + $0xc0] sm:$0xff]
          %v830 = vld [vmem:[#allocation9 + $0xc8] sm:$0xff]
          %v831 = vld [vmem:[#allocation9 + $0xd0] sm:$0xff]
          %v832 = vld [vmem:[#allocation9 + $0xd8] sm:$0xff]
          %v833 = vld [vmem:[#allocation9 + $0xe0] sm:$0xff]
          %v834 = vld [vmem:[#allocation9 + $0xe8] sm:$0xff]
          %v835 = vld [vmem:[#allocation9 + $0xf0] sm:$0xff]
          %v836 = vld [vmem:[#allocation9 + $0xf8] sm:$0xff]
          %v837 = vld [vmem:[#allocation9 + $0x100] sm:$0xff]
          %v838 = vld [vmem:[#allocation9 + $0x108] sm:$0xff]
          %v839 = vld [vmem:[#allocation9 + $0x110] sm:$0xff]
          %v840 = vld [vmem:[#allocation9 + $0x118] sm:$0xff]
          %v841 = vld [vmem:[#allocation9 + $0x120] sm:$0xff]
          %v842 = vld [vmem:[#allocation9 + $0x128] sm:$0xff]
          %v843 = vld [vmem:[#allocation9 + $0x130] sm:$0xff]
          %v844 = vld [vmem:[#allocation9 + $0x138] sm:$0xff]
          %v845 = vld [vmem:[#allocation9 + $0x140] sm:$0xff]
          %v846 = vld [vmem:[#allocation9 + $0x148] sm:$0xff]
          %v847 = vld [vmem:[#allocation9 + $0x150] sm:$0xff]
          %v848 = vld [vmem:[#allocation9 + $0x158] sm:$0xff]
          %v849 = vld [vmem:[#allocation9 + $0x160] sm:$0xff]
          %v850 = vld [vmem:[#allocation9 + $0x168] sm:$0xff]
          %v851 = vld [vmem:[#allocation9 + $0x170] sm:$0xff]
          %v852 = vld [vmem:[#allocation9 + $0x178] sm:$0xff]
          %v853 = vld [vmem:[#allocation9 + $0x180] sm:$0xff]
          %v854 = vld [vmem:[#allocation9 + $0x188] sm:$0xff]
          %v855 = vld [vmem:[#allocation9 + $0x190] sm:$0xff]
          %v856 = vld [vmem:[#allocation9 + $0x198] sm:$0xff]
          %v857 = vld [vmem:[#allocation9 + $0x1a0] sm:$0xff]
          %v858 = vld [vmem:[#allocation9 + $0x1a8] sm:$0xff]
          %v859 = vld [vmem:[#allocation9 + $0x1b0] sm:$0xff]
          %v860 = vld [vmem:[#allocation9 + $0x1b8] sm:$0xff]
          %v861 = vld [vmem:[#allocation9 + $0x1c0] sm:$0xff]
          %v862 = vld [vmem:[#allocation9 + $0x1c8] sm:$0xff]
          %v863 = vld [vmem:[#allocation9 + $0x1d0] sm:$0xff]
          %v864 = vld [vmem:[#allocation9 + $0x1d8] sm:$0xff]
          %v865 = vld [vmem:[#allocation9 + $0x1e0] sm:$0xff]
          %v866 = vld [vmem:[#allocation9 + $0x1e8] sm:$0xff]
          %v867 = vld [vmem:[#allocation9 + $0x1f0] sm:$0xff]
          %v868 = vld [vmem:[#allocation9 + $0x1f8] sm:$0xff]
          %v869 = vpack.c.bf16 %v795, %v795
          %v870 = vpack.c.bf16 %v797, %v797
          %v871 = vld [vmem:[#allocation11] sm:$0xff]
          %v872 = vld [vmem:[#allocation11 + $0x8] sm:$0xff]
          %v873 = vld [vmem:[#allocation11 + $0x10] sm:$0xff]
          %v874 = vld [vmem:[#allocation11 + $0x18] sm:$0xff]
          %v875 = vld [vmem:[#allocation11 + $0x20] sm:$0xff]
          %v876 = vld [vmem:[#allocation11 + $0x28] sm:$0xff]
          %v877 = vld [vmem:[#allocation11 + $0x30] sm:$0xff]
          %v878 = vld [vmem:[#allocation11 + $0x38] sm:$0xff]
          %v879 = vld [vmem:[#allocation11 + $0x40] sm:$0xff]
          %v880 = vld [vmem:[#allocation11 + $0x48] sm:$0xff]
          %v881 = vld [vmem:[#allocation11 + $0x50] sm:$0xff]
          %v882 = vld [vmem:[#allocation11 + $0x58] sm:$0xff]
          %v883 = vld [vmem:[#allocation11 + $0x60] sm:$0xff]
          %v884 = vld [vmem:[#allocation11 + $0x68] sm:$0xff]
          %v885 = vld [vmem:[#allocation11 + $0x70] sm:$0xff]
          %v886 = vld [vmem:[#allocation11 + $0x78] sm:$0xff]
          %v887 = vld [vmem:[#allocation11 + $0x80] sm:$0xff]
          %v888 = vld [vmem:[#allocation11 + $0x88] sm:$0xff]
          %v889 = vld [vmem:[#allocation11 + $0x90] sm:$0xff]
          %v890 = vld [vmem:[#allocation11 + $0x98] sm:$0xff]
          %v891 = vld [vmem:[#allocation11 + $0xa0] sm:$0xff]
          %v892 = vld [vmem:[#allocation11 + $0xa8] sm:$0xff]
          %v893 = vld [vmem:[#allocation11 + $0xb0] sm:$0xff]
          %v894 = vld [vmem:[#allocation11 + $0xb8] sm:$0xff]
          %v895 = vld [vmem:[#allocation11 + $0xc0] sm:$0xff]
          %v896 = vld [vmem:[#allocation11 + $0xc8] sm:$0xff]
          %v897 = vld [vmem:[#allocation11 + $0xd0] sm:$0xff]
          %v898 = vld [vmem:[#allocation11 + $0xd8] sm:$0xff]
          %v899 = vld [vmem:[#allocation11 + $0xe0] sm:$0xff]
          %v900 = vld [vmem:[#allocation11 + $0xe8] sm:$0xff]
          %v901 = vld [vmem:[#allocation11 + $0xf0] sm:$0xff]
          %v902 = vld [vmem:[#allocation11 + $0xf8] sm:$0xff]
          %v935 = vunpack.c.l.b16 %v871
          %v936 = vunpack.c.h.b16 %v871
          %v937 = vunpack.c.l.b16 %v872
          %v938 = vunpack.c.h.b16 %v872
          %v939 = vunpack.c.l.b16 %v873
          %v940 = vunpack.c.h.b16 %v873
          %v941 = vunpack.c.l.b16 %v874
          %v942 = vunpack.c.h.b16 %v874
          %v943 = vunpack.c.l.b16 %v875
          %v944 = vunpack.c.h.b16 %v875
          %v945 = vunpack.c.l.b16 %v876
          %v946 = vunpack.c.h.b16 %v876
          %v947 = vunpack.c.l.b16 %v877
          %v948 = vunpack.c.h.b16 %v877
          %v949 = vunpack.c.l.b16 %v878
          %v950 = vunpack.c.h.b16 %v878
          %v951 = vunpack.c.l.b16 %v879
          %v952 = vunpack.c.h.b16 %v879
          %v953 = vunpack.c.l.b16 %v880
          %v954 = vunpack.c.h.b16 %v880
          %v955 = vunpack.c.l.b16 %v881
          %v956 = vunpack.c.h.b16 %v881
          %v957 = vunpack.c.l.b16 %v882
          %v958 = vunpack.c.h.b16 %v882
          %v959 = vunpack.c.l.b16 %v883
          %v960 = vunpack.c.h.b16 %v883
          %v961 = vunpack.c.l.b16 %v884
          %v962 = vunpack.c.h.b16 %v884
          %v963 = vunpack.c.l.b16 %v885
          %v964 = vunpack.c.h.b16 %v885
          %v965 = vunpack.c.l.b16 %v886
          %v966 = vunpack.c.h.b16 %v886
          %v967 = vunpack.c.l.b16 %v887
          %v968 = vunpack.c.h.b16 %v887
          %v969 = vunpack.c.l.b16 %v888
          %v970 = vunpack.c.h.b16 %v888
          %v971 = vunpack.c.l.b16 %v889
          %v972 = vunpack.c.h.b16 %v889
          %v973 = vunpack.c.l.b16 %v890
          %v974 = vunpack.c.h.b16 %v890
          %v975 = vunpack.c.l.b16 %v891
          %v976 = vunpack.c.h.b16 %v891
          %v977 = vunpack.c.l.b16 %v892
          %v978 = vunpack.c.h.b16 %v892
          %v979 = vunpack.c.l.b16 %v893
          %v980 = vunpack.c.h.b16 %v893
          %v981 = vunpack.c.l.b16 %v894
          %v982 = vunpack.c.h.b16 %v894
          %v983 = vunpack.c.l.b16 %v895
          %v984 = vunpack.c.h.b16 %v895
          %v985 = vunpack.c.l.b16 %v896
          %v986 = vunpack.c.h.b16 %v896
          %v987 = vunpack.c.l.b16 %v897
          %v988 = vunpack.c.h.b16 %v897
          %v989 = vunpack.c.l.b16 %v898
          %v990 = vunpack.c.h.b16 %v898
          %v991 = vunpack.c.l.b16 %v899
          %v992 = vunpack.c.h.b16 %v899
          %v993 = vunpack.c.l.b16 %v900
          %v994 = vunpack.c.h.b16 %v900
          %v995 = vunpack.c.l.b16 %v901
          %v996 = vunpack.c.h.b16 %v901
          %v997 = vunpack.c.l.b16 %v902
          %v998 = vunpack.c.h.b16 %v902
          %v999 = vpack.c.b16 %v937, %v935
          %v1000 = vpack.c.b16 %v938, %v936
          %v1001 = vpack.c.b16 %v941, %v939
          %v1002 = vpack.c.b16 %v942, %v940
          %v1003 = vpack.c.b16 %v945, %v943
          %v1004 = vpack.c.b16 %v946, %v944
          %v1005 = vpack.c.b16 %v949, %v947
          %v1006 = vpack.c.b16 %v950, %v948
          %v1007 = vpack.c.b16 %v953, %v951
          %v1008 = vpack.c.b16 %v954, %v952
          %v1009 = vpack.c.b16 %v957, %v955
          %v1010 = vpack.c.b16 %v958, %v956
          %v1011 = vpack.c.b16 %v961, %v959
          %v1012 = vpack.c.b16 %v962, %v960
          %v1013 = vpack.c.b16 %v965, %v963
          %v1014 = vpack.c.b16 %v966, %v964
          %v1015 = vpack.c.b16 %v969, %v967
          %v1016 = vpack.c.b16 %v970, %v968
          %v1017 = vpack.c.b16 %v973, %v971
          %v1018 = vpack.c.b16 %v974, %v972
          %v1019 = vpack.c.b16 %v977, %v975
          %v1020 = vpack.c.b16 %v978, %v976
          %v1021 = vpack.c.b16 %v981, %v979
          %v1022 = vpack.c.b16 %v982, %v980
          %v1023 = vpack.c.b16 %v985, %v983
          %v1024 = vpack.c.b16 %v986, %v984
          %v1025 = vpack.c.b16 %v989, %v987
          %v1026 = vpack.c.b16 %v990, %v988
          %v1027 = vpack.c.b16 %v993, %v991
          %v1028 = vpack.c.b16 %v994, %v992
          %v1029 = vpack.c.b16 %v997, %v995
          %v1030 = vpack.c.b16 %v998, %v996
          %1063 = vmatprep.subr.bf16.mxu0 %v1014
          %1064 = vmatpush1.bf16.msra.mxu0 %v1013
          %1065 = vmatprep.subr.bf16.mxu0 %v1012
          %1066 = vmatpush1.bf16.msra.mxu0 %v1011
          %1067 = vmatprep.subr.bf16.mxu0 %v1010
          %1068 = vmatpush1.bf16.msra.mxu0 %v1009
          %1069 = vmatprep.subr.bf16.mxu0 %v1008
          %1070 = vmatpush1.bf16.msra.mxu0 %v1007
          %1071 = vmatprep.subr.bf16.mxu0 %v1006
          %1072 = vmatpush1.bf16.msra.mxu0 %v1005
          %1073 = vmatprep.subr.bf16.mxu0 %v1004
          %1074 = vmatpush1.bf16.msra.mxu0 %v1003
          %1075 = vmatprep.subr.bf16.mxu0 %v1002
          %1076 = vmatpush1.bf16.msra.mxu0 %v1001
          %1077 = vmatprep.subr.bf16.mxu0 %v1000
          %1078 = vmatpush1.bf16.msra.mxu0 %v999
          %1079 = vmatprep.subr.bf16.mxu0 %v1030
          %1080 = vmatpush2.bf16.msra.mxu0 %v1029
          %1081 = vmatprep.subr.bf16.mxu0 %v1028
          %1082 = vmatpush2.bf16.msra.mxu0 %v1027
          %1083 = vmatprep.subr.bf16.mxu0 %v1026
          %1084 = vmatpush2.bf16.msra.mxu0 %v1025
          %1085 = vmatprep.subr.bf16.mxu0 %v1024
          %1086 = vmatpush2.bf16.msra.mxu0 %v1023
          %1087 = vmatprep.subr.bf16.mxu0 %v1022
          %1088 = vmatpush2.bf16.msra.mxu0 %v1021
          %1089 = vmatprep.subr.bf16.mxu0 %v1020
          %1090 = vmatpush2.bf16.msra.mxu0 %v1019
          %1091 = vmatprep.subr.bf16.mxu0 %v1018
          %1092 = vmatpush2.bf16.msra.mxu0 %v1017
          %1093 = vmatprep.subr.bf16.mxu0 %v1016
          %1094 = vmatpush2.bf16.msra.mxu0 %v1015
          %1095 = vmatprep.mubr.bf16.mxu0 %v870
          %1096 = vmatmul.mubr.bf16.gmra.mxu0 %v869
          %v1097 = vpop.f32.mrf.mxu0
          %v1098 = vadd.f32 0.0, %v1097
          %v1099 = vpop.f32.mrf.mxu0
          %v1100 = vadd.f32 0.0, %v1099
          %v1101 = vpop.f32.mrf.mxu0
          %v1102 = vpop.f32.mrf.mxu0
          %1103 = vdwg.mxu0
          %v1168 = vunpack.c.l.b16 %v805
          %v1169 = vunpack.c.h.b16 %v805
          %v1170 = vunpack.c.l.b16 %v806
          %v1171 = vunpack.c.h.b16 %v806
          %v1172 = vunpack.c.l.b16 %v807
          %v1173 = vunpack.c.h.b16 %v807
          %v1174 = vunpack.c.l.b16 %v808
          %v1175 = vunpack.c.h.b16 %v808
          %v1176 = vunpack.c.l.b16 %v809
          %v1177 = vunpack.c.h.b16 %v809
          %v1178 = vunpack.c.l.b16 %v810
          %v1179 = vunpack.c.h.b16 %v810
          %v1180 = vunpack.c.l.b16 %v811
          %v1181 = vunpack.c.h.b16 %v811
          %v1182 = vunpack.c.l.b16 %v812
          %v1183 = vunpack.c.h.b16 %v812
          %v1184 = vunpack.c.l.b16 %v813
          %v1185 = vunpack.c.h.b16 %v813
          %v1186 = vunpack.c.l.b16 %v814
          %v1187 = vunpack.c.h.b16 %v814
          %v1188 = vunpack.c.l.b16 %v815
          %v1189 = vunpack.c.h.b16 %v815
          %v1190 = vunpack.c.l.b16 %v816
          %v1191 = vunpack.c.h.b16 %v816
          %v1192 = vunpack.c.l.b16 %v817
          %v1193 = vunpack.c.h.b16 %v817
          %v1194 = vunpack.c.l.b16 %v818
          %v1195 = vunpack.c.h.b16 %v818
          %v1196 = vunpack.c.l.b16 %v819
          %v1197 = vunpack.c.h.b16 %v819
          %v1198 = vunpack.c.l.b16 %v820
          %v1199 = vunpack.c.h.b16 %v820
          %v1200 = vunpack.c.l.b16 %v821
          %v1201 = vunpack.c.h.b16 %v821
          %v1202 = vunpack.c.l.b16 %v822
          %v1203 = vunpack.c.h.b16 %v822
          %v1204 = vunpack.c.l.b16 %v823
          %v1205 = vunpack.c.h.b16 %v823
          %v1206 = vunpack.c.l.b16 %v824
          %v1207 = vunpack.c.h.b16 %v824
          %v1208 = vunpack.c.l.b16 %v825
          %v1209 = vunpack.c.h.b16 %v825
          %v1210 = vunpack.c.l.b16 %v826
          %v1211 = vunpack.c.h.b16 %v826
          %v1212 = vunpack.c.l.b16 %v827
          %v1213 = vunpack.c.h.b16 %v827
          %v1214 = vunpack.c.l.b16 %v828
          %v1215 = vunpack.c.h.b16 %v828
          %v1216 = vunpack.c.l.b16 %v829
          %v1217 = vunpack.c.h.b16 %v829
          %v1218 = vunpack.c.l.b16 %v830
          %v1219 = vunpack.c.h.b16 %v830
          %v1220 = vunpack.c.l.b16 %v831
          %v1221 = vunpack.c.h.b16 %v831
          %v1222 = vunpack.c.l.b16 %v832
          %v1223 = vunpack.c.h.b16 %v832
          %v1224 = vunpack.c.l.b16 %v833
          %v1225 = vunpack.c.h.b16 %v833
          %v1226 = vunpack.c.l.b16 %v834
          %v1227 = vunpack.c.h.b16 %v834
          %v1228 = vunpack.c.l.b16 %v835
          %v1229 = vunpack.c.h.b16 %v835
          %v1230 = vunpack.c.l.b16 %v836
          %v1231 = vunpack.c.h.b16 %v836
          %v1232 = vunpack.c.l.b16 %v837
          %v1233 = vunpack.c.h.b16 %v837
          %v1234 = vunpack.c.l.b16 %v838
          %v1235 = vunpack.c.h.b16 %v838
          %v1236 = vunpack.c.l.b16 %v839
          %v1237 = vunpack.c.h.b16 %v839
          %v1238 = vunpack.c.l.b16 %v840
          %v1239 = vunpack.c.h.b16 %v840
          %v1240 = vunpack.c.l.b16 %v841
          %v1241 = vunpack.c.h.b16 %v841
          %v1242 = vunpack.c.l.b16 %v842
          %v1243 = vunpack.c.h.b16 %v842
          %v1244 = vunpack.c.l.b16 %v843
          %v1245 = vunpack.c.h.b16 %v843
          %v1246 = vunpack.c.l.b16 %v844
          %v1247 = vunpack.c.h.b16 %v844
          %v1248 = vunpack.c.l.b16 %v845
          %v1249 = vunpack.c.h.b16 %v845
          %v1250 = vunpack.c.l.b16 %v846
          %v1251 = vunpack.c.h.b16 %v846
          %v1252 = vunpack.c.l.b16 %v847
          %v1253 = vunpack.c.h.b16 %v847
          %v1254 = vunpack.c.l.b16 %v848
          %v1255 = vunpack.c.h.b16 %v848
          %v1256 = vunpack.c.l.b16 %v849
          %v1257 = vunpack.c.h.b16 %v849
          %v1258 = vunpack.c.l.b16 %v850
          %v1259 = vunpack.c.h.b16 %v850
          %v1260 = vunpack.c.l.b16 %v851
          %v1261 = vunpack.c.h.b16 %v851
          %v1262 = vunpack.c.l.b16 %v852
          %v1263 = vunpack.c.h.b16 %v852
          %v1264 = vunpack.c.l.b16 %v853
          %v1265 = vunpack.c.h.b16 %v853
          %v1266 = vunpack.c.l.b16 %v854
          %v1267 = vunpack.c.h.b16 %v854
          %v1268 = vunpack.c.l.b16 %v855
          %v1269 = vunpack.c.h.b16 %v855
          %v1270 = vunpack.c.l.b16 %v856
          %v1271 = vunpack.c.h.b16 %v856
          %v1272 = vunpack.c.l.b16 %v857
          %v1273 = vunpack.c.h.b16 %v857
          %v1274 = vunpack.c.l.b16 %v858
          %v1275 = vunpack.c.h.b16 %v858
          %v1276 = vunpack.c.l.b16 %v859
          %v1277 = vunpack.c.h.b16 %v859
          %v1278 = vunpack.c.l.b16 %v860
          %v1279 = vunpack.c.h.b16 %v860
          %v1280 = vunpack.c.l.b16 %v861
          %v1281 = vunpack.c.h.b16 %v861
          %v1282 = vunpack.c.l.b16 %v862
          %v1283 = vunpack.c.h.b16 %v862
          %v1284 = vunpack.c.l.b16 %v863
          %v1285 = vunpack.c.h.b16 %v863
          %v1286 = vunpack.c.l.b16 %v864
          %v1287 = vunpack.c.h.b16 %v864
          %v1288 = vunpack.c.l.b16 %v865
          %v1289 = vunpack.c.h.b16 %v865
          %v1290 = vunpack.c.l.b16 %v866
          %v1291 = vunpack.c.h.b16 %v866
          %v1292 = vunpack.c.l.b16 %v867
          %v1293 = vunpack.c.h.b16 %v867
          %v1294 = vunpack.c.l.b16 %v868
          %v1295 = vunpack.c.h.b16 %v868
          %v1296 = vpack.c.b16 %v1170, %v1168
          %v1297 = vpack.c.b16 %v1171, %v1169
          %v1298 = vpack.c.b16 %v1174, %v1172
          %v1299 = vpack.c.b16 %v1175, %v1173
          %v1300 = vpack.c.b16 %v1178, %v1176
          %v1301 = vpack.c.b16 %v1179, %v1177
          %v1302 = vpack.c.b16 %v1182, %v1180
          %v1303 = vpack.c.b16 %v1183, %v1181
          %v1304 = vpack.c.b16 %v1186, %v1184
          %v1305 = vpack.c.b16 %v1187, %v1185
          %v1306 = vpack.c.b16 %v1190, %v1188
          %v1307 = vpack.c.b16 %v1191, %v1189
          %v1308 = vpack.c.b16 %v1194, %v1192
          %v1309 = vpack.c.b16 %v1195, %v1193
          %v1310 = vpack.c.b16 %v1198, %v1196
          %v1311 = vpack.c.b16 %v1199, %v1197
          %v1312 = vpack.c.b16 %v1202, %v1200
          %v1313 = vpack.c.b16 %v1203, %v1201
          %v1314 = vpack.c.b16 %v1206, %v1204
          %v1315 = vpack.c.b16 %v1207, %v1205
          %v1316 = vpack.c.b16 %v1210, %v1208
          %v1317 = vpack.c.b16 %v1211, %v1209
          %v1318 = vpack.c.b16 %v1214, %v1212
          %v1319 = vpack.c.b16 %v1215, %v1213
          %v1320 = vpack.c.b16 %v1218, %v1216
          %v1321 = vpack.c.b16 %v1219, %v1217
          %v1322 = vpack.c.b16 %v1222, %v1220
          %v1323 = vpack.c.b16 %v1223, %v1221
          %v1324 = vpack.c.b16 %v1226, %v1224
          %v1325 = vpack.c.b16 %v1227, %v1225
          %v1326 = vpack.c.b16 %v1230, %v1228
          %v1327 = vpack.c.b16 %v1231, %v1229
          %v1328 = vpack.c.b16 %v1234, %v1232
          %v1329 = vpack.c.b16 %v1235, %v1233
          %v1330 = vpack.c.b16 %v1238, %v1236
          %v1331 = vpack.c.b16 %v1239, %v1237
          %v1332 = vpack.c.b16 %v1242, %v1240
          %v1333 = vpack.c.b16 %v1243, %v1241
          %v1334 = vpack.c.b16 %v1246, %v1244
          %v1335 = vpack.c.b16 %v1247, %v1245
          %v1336 = vpack.c.b16 %v1250, %v1248
          %v1337 = vpack.c.b16 %v1251, %v1249
          %v1338 = vpack.c.b16 %v1254, %v1252
          %v1339 = vpack.c.b16 %v1255, %v1253
          %v1340 = vpack.c.b16 %v1258, %v1256
          %v1341 = vpack.c.b16 %v1259, %v1257
          %v1342 = vpack.c.b16 %v1262, %v1260
          %v1343 = vpack.c.b16 %v1263, %v1261
          %v1344 = vpack.c.b16 %v1266, %v1264
          %v1345 = vpack.c.b16 %v1267, %v1265
          %v1346 = vpack.c.b16 %v1270, %v1268
          %v1347 = vpack.c.b16 %v1271, %v1269
          %v1348 = vpack.c.b16 %v1274, %v1272
          %v1349 = vpack.c.b16 %v1275, %v1273
          %v1350 = vpack.c.b16 %v1278, %v1276
          %v1351 = vpack.c.b16 %v1279, %v1277
          %v1352 = vpack.c.b16 %v1282, %v1280
          %v1353 = vpack.c.b16 %v1283, %v1281
          %v1354 = vpack.c.b16 %v1286, %v1284
          %v1355 = vpack.c.b16 %v1287, %v1285
          %v1356 = vpack.c.b16 %v1290, %v1288
          %v1357 = vpack.c.b16 %v1291, %v1289
          %v1358 = vpack.c.b16 %v1294, %v1292
          %v1359 = vpack.c.b16 %v1295, %v1293
          %1424 = vmatprep.subr.bf16.mxu0 %v1311
          %1425 = vmatpush1.bf16.msra.mxu0 %v1310
          %1426 = vmatprep.subr.bf16.mxu0 %v1309
          %1427 = vmatpush1.bf16.msra.mxu0 %v1308
          %1428 = vmatprep.subr.bf16.mxu0 %v1307
          %1429 = vmatpush1.bf16.msra.mxu0 %v1306
          %1430 = vmatprep.subr.bf16.mxu0 %v1305
          %1431 = vmatpush1.bf16.msra.mxu0 %v1304
          %1432 = vmatprep.subr.bf16.mxu0 %v1303
          %1433 = vmatpush1.bf16.msra.mxu0 %v1302
          %1434 = vmatprep.subr.bf16.mxu0 %v1301
          %1435 = vmatpush1.bf16.msra.mxu0 %v1300
          %1436 = vmatprep.subr.bf16.mxu0 %v1299
          %1437 = vmatpush1.bf16.msra.mxu0 %v1298
          %1438 = vmatprep.subr.bf16.mxu0 %v1297
          %1439 = vmatpush1.bf16.msra.mxu0 %v1296
          %1440 = vmatprep.subr.bf16.mxu0 %v1327
          %1441 = vmatpush2.bf16.msra.mxu0 %v1326
          %1442 = vmatprep.subr.bf16.mxu0 %v1325
          %1443 = vmatpush2.bf16.msra.mxu0 %v1324
          %1444 = vmatprep.subr.bf16.mxu0 %v1323
          %1445 = vmatpush2.bf16.msra.mxu0 %v1322
          %1446 = vmatprep.subr.bf16.mxu0 %v1321
          %1447 = vmatpush2.bf16.msra.mxu0 %v1320
          %1448 = vmatprep.subr.bf16.mxu0 %v1319
          %1449 = vmatpush2.bf16.msra.mxu0 %v1318
          %1450 = vmatprep.subr.bf16.mxu0 %v1317
          %1451 = vmatpush2.bf16.msra.mxu0 %v1316
          %1452 = vmatprep.subr.bf16.mxu0 %v1315
          %1453 = vmatpush2.bf16.msra.mxu0 %v1314
          %1454 = vmatprep.subr.bf16.mxu0 %v1313
          %1455 = vmatpush2.bf16.msra.mxu0 %v1312
          %1456 = vmatprep.mubr.bf16.mxu0 %v802
          %1457 = vmatmul.mubr.bf16.gmra.mxu0 %v801
          %v1458 = vpop.f32.mrf.mxu0
          %v1459 = vadd.f32 %v1098, %v1458
          %v1460 = vpop.f32.mrf.mxu0
          %v1461 = vadd.f32 %v1100, %v1460
          %v1462 = vpop.f32.mrf.mxu0
          %v1463 = vpop.f32.mrf.mxu0
          %1464 = vdwg.mxu0
          %1465 = vmatprep.subr.bf16.mxu0 %v1343
          %1466 = vmatpush1.bf16.msra.mxu0 %v1342
          %1467 = vmatprep.subr.bf16.mxu0 %v1341
          %1468 = vmatpush1.bf16.msra.mxu0 %v1340
          %1469 = vmatprep.subr.bf16.mxu0 %v1339
          %1470 = vmatpush1.bf16.msra.mxu0 %v1338
          %1471 = vmatprep.subr.bf16.mxu0 %v1337
          %1472 = vmatpush1.bf16.msra.mxu0 %v1336
          %1473 = vmatprep.subr.bf16.mxu0 %v1335
          %1474 = vmatpush1.bf16.msra.mxu0 %v1334
          %1475 = vmatprep.subr.bf16.mxu0 %v1333
          %1476 = vmatpush1.bf16.msra.mxu0 %v1332
          %1477 = vmatprep.subr.bf16.mxu0 %v1331
          %1478 = vmatpush1.bf16.msra.mxu0 %v1330
          %1479 = vmatprep.subr.bf16.mxu0 %v1329
          %1480 = vmatpush1.bf16.msra.mxu0 %v1328
          %1481 = vmatprep.subr.bf16.mxu0 %v1359
          %1482 = vmatpush2.bf16.msra.mxu0 %v1358
          %1483 = vmatprep.subr.bf16.mxu0 %v1357
          %1484 = vmatpush2.bf16.msra.mxu0 %v1356
          %1485 = vmatprep.subr.bf16.mxu0 %v1355
          %1486 = vmatpush2.bf16.msra.mxu0 %v1354
          %1487 = vmatprep.subr.bf16.mxu0 %v1353
          %1488 = vmatpush2.bf16.msra.mxu0 %v1352
          %1489 = vmatprep.subr.bf16.mxu0 %v1351
          %1490 = vmatpush2.bf16.msra.mxu0 %v1350
          %1491 = vmatprep.subr.bf16.mxu0 %v1349
          %1492 = vmatpush2.bf16.msra.mxu0 %v1348
          %1493 = vmatprep.subr.bf16.mxu0 %v1347
          %1494 = vmatpush2.bf16.msra.mxu0 %v1346
          %1495 = vmatprep.subr.bf16.mxu0 %v1345
          %1496 = vmatpush2.bf16.msra.mxu0 %v1344
          %1497 = vmatprep.mubr.bf16.mxu0 %v804
          %1498 = vmatmul.mubr.bf16.gmra.mxu0 %v803
          %v1499 = vpop.f32.mrf.mxu0
          %v1500 = vadd.f32 %v1459, %v1499
          %v1501 = vpop.f32.mrf.mxu0
          %v1502 = vadd.f32 %v1461, %v1501
          %v1503 = vpop.f32.mrf.mxu0
          %v1504 = vpop.f32.mrf.mxu0
          %1505 = vdwg.mxu0
          %v1507 = vlaneseq
          %v1508 = vshrl.u32 %v1507, 7
          %v1509 = vsub.s32 0, %v1508
          %v1510 = vrot.slane %v515, %v1509
          %v1511 = vlaneseq
          %v1512 = vshrl.u32 %v1511, 7
          %v1513 = vsub.s32 1, %v1512
          %v1514 = vrot.slane %v515, %v1513
          %v1517 = vadd.f32 %v1500, %v1510
          %v1518 = vadd.f32 %v1502, %v1514
          %v1519 = vpack.c.bf16 %v1517, %v1517
          %v1520 = vpack.c.bf16 %v1518, %v1518
          %v1523 = vunpack.c.l.b16 %v1519
          %v1524 = vunpack.c.l.b16 %v1520
          %v1525 = vpack.c.b16 %v1524, %v1523
          %s1527 = sshra.s32 %s502, 3
          %s1528 = sand.u32 %s502, 7
          %s1529 = smul.u32 %s1527, 2
          %s1530 = smul.addr %s1529, 4
          %s1531 = scalar_lea.vmem [#allocation2], %s1530
          %1532 = vst [vmem:[%s1531] sm:$0xff] %v1525
          %v1533 = vld [vmem:[#allocation4] sm:$0xf]
          %v1534 = vunpack.c.l.bf16 %v1519
          %v1535 = vunpack.c.l.bf16 %v1520
          %v1536 = vrot.slane %v1534, 4
          %v1537 = vadd.f32 %v1534, %v1536
          %v1538 = vrot.slane %v1537, 2
          %v1539 = vadd.f32 %v1537, %v1538
          %v1540 = vrot.slane %v1539, 1
          %v1541 = vadd.f32 %v1539, %v1540
          %v1542 = vrot.slane %v1535, 4
          %v1543 = vadd.f32 %v1535, %v1542
          %v1544 = vrot.slane %v1543, 2
          %v1545 = vadd.f32 %v1543, %v1544
          %v1546 = vrot.slane %v1545, 1
          %v1547 = vadd.f32 %v1545, %v1546
          %v1548 = vmul.f32 %v1534, %v1534
          %v1549 = vmul.f32 %v1535, %v1535
          %v1550 = vrot.slane %v1548, 4
          %v1551 = vadd.f32 %v1548, %v1550
          %v1552 = vrot.slane %v1551, 2
          %v1553 = vadd.f32 %v1551, %v1552
          %v1554 = vrot.slane %v1553, 1
          %v1555 = vadd.f32 %v1553, %v1554
          %v1556 = vrot.slane %v1549, 4
          %v1557 = vadd.f32 %v1549, %v1556
          %v1558 = vrot.slane %v1557, 2
          %v1559 = vadd.f32 %v1557, %v1558
          %v1560 = vrot.slane %v1559, 1
          %v1561 = vadd.f32 %v1559, %v1560
          %vm1562 = vcmask 1040384
          %v1563 = vsel %vm1562, %v1541, %v1555
          %v1564 = vsel %vm1562, %v1547, %v1561
          %v1567 = vcombine.low %v1563, %v1564
          %v1569 = vunpack.c.l.s4 1983009808
          %v1570 = vunpack.c.0.s8 %v1569
          %v1571 = vlaneseq
          %v1572 = vshrl.u32 %v1571, 7
          %v1573 = vsub.s32 %v1570, %v1572
          %v1574 = vrot.slane %v1567, %v1573
          %v1576 = vadd.f32 %v1533, %v1574
          %1577 = vst [vmem:[#allocation4] sm:$0xf] %v1576
        $region88: #{docking_forward.1} parent=59 // pred_fallthru
          _
        %p1578 = scmp.eq.s32.totalorder %s32, 1
        // Predicated region
        $region93: #{docking_forward.1} parent=59 // pred_check
          %p1579 = pneg %p1578
        $region94: #{docking_forward.1} parent=59 // pred_check_branch
          %1581 = sbr.rel (%p1579) target = $region96
        $region95: #{docking_forward.1} parent=59 // pred_region
          %v1582 = vld [vmem:[#allocation14] sm:$0x3]
          %v1583 = vld [vmem:[#allocation14 + $0x2] sm:$0x3]
          %v1584 = vld [vmem:[#allocation14 + $0x4] sm:$0x1]
          %v1585 = vld [vmem:[#allocation4] ss:$2 sm:$0x3]
          %v1586 = vmul.f32 %v1585, 0.125
          %s1587 = scalar_lea.vmem [#allocation4], 1
          %v1588 = vld [vmem:[%s1587] ss:$2 sm:$0x3]
          %v1589 = vmul.f32 %v1588, 0.125
          %v1590 = vmul.f32 %v1586, %v1586
          %v1591 = vsub.f32 %v1589, %v1590
          %v1592 = vadd.f32 %v1591, 1e-05
          %v1593 = vrsqrt.pop %v1592
          %v1594 = vmul.f32 %v1582, %v1593
          %v1595 = vmul.f32 %v1586, %v1594
          %v1596 = vsub.f32 %v1583, %v1595
          %s1597 = sshra.s32 %s502, 3
          %s1598 = sand.u32 %s502, 7
          %s1599 = smul.u32 %s1597, 2
          %s1600 = smul.addr %s1599, 4
          %s1601 = scalar_lea.vmem [#allocation2], %s1600
          %v1602 = vld [vmem:[%s1601] sm:$0xff]
          %v1603 = vunpack.c.l.bf16 %v1602
          %v1604 = vunpack.c.h.bf16 %v1602
          %v1606 = vlaneseq
          %v1607 = vshrl.u32 %v1606, 7
          %v1608 = vsub.s32 0, %v1607
          %v1609 = vrot.slane %v1594, %v1608
          %v1610 = vlaneseq
          %v1611 = vshrl.u32 %v1610, 7
          %v1612 = vsub.s32 1, %v1611
          %v1613 = vrot.slane %v1594, %v1612
          %v1616 = vmul.f32 %v1603, %v1609
          %v1617 = vmul.f32 %v1604, %v1613
          %v1619 = vlaneseq
          %v1620 = vshrl.u32 %v1619, 7
          %v1621 = vsub.s32 0, %v1620
          %v1622 = vrot.slane %v1596, %v1621
          %v1623 = vlaneseq
          %v1624 = vshrl.u32 %v1623, 7
          %v1625 = vsub.s32 1, %v1624
          %v1626 = vrot.slane %v1596, %v1625
          %v1629 = vadd.f32 %v1616, %v1622
          %v1630 = vadd.f32 %v1617, %v1626
          %v1631 = vmax.f32 %v1629, 0.0
          %v1632 = vmax.f32 %v1630, 0.0
          %v1633 = vpack.c.bf16 %v1631, %v1631
          %v1634 = vpack.c.bf16 %v1632, %v1632
          %v1635 = vld [vmem:[#allocation12] sm:$0xf]
          %v1636 = vld [vmem:[#allocation12 + $0x4] sm:$0xf]
          %v1637 = vld [vmem:[#allocation12 + $0x8] sm:$0xf]
          %v1638 = vld [vmem:[#allocation12 + $0xc] sm:$0xf]
          %v1639 = vld [vmem:[#allocation12 + $0x10] sm:$0xf]
          %v1640 = vld [vmem:[#allocation12 + $0x14] sm:$0xf]
          %v1641 = vld [vmem:[#allocation12 + $0x18] sm:$0xf]
          %v1642 = vld [vmem:[#allocation12 + $0x1c] sm:$0xf]
          %v1643 = vld [vmem:[#allocation12 + $0x20] sm:$0xf]
          %v1644 = vld [vmem:[#allocation12 + $0x24] sm:$0xf]
          %v1645 = vld [vmem:[#allocation12 + $0x28] sm:$0xf]
          %v1646 = vld [vmem:[#allocation12 + $0x2c] sm:$0xf]
          %v1647 = vld [vmem:[#allocation12 + $0x30] sm:$0xf]
          %v1648 = vld [vmem:[#allocation12 + $0x34] sm:$0xf]
          %v1649 = vld [vmem:[#allocation12 + $0x38] sm:$0xf]
          %v1650 = vld [vmem:[#allocation12 + $0x3c] sm:$0xf]
          %v1651 = vld [vmem:[#allocation12 + $0x40] sm:$0xf]
          %v1652 = vld [vmem:[#allocation12 + $0x44] sm:$0xf]
          %v1653 = vld [vmem:[#allocation12 + $0x48] sm:$0xf]
          %v1654 = vld [vmem:[#allocation12 + $0x4c] sm:$0xf]
          %v1655 = vld [vmem:[#allocation12 + $0x50] sm:$0xf]
          %v1656 = vld [vmem:[#allocation12 + $0x54] sm:$0xf]
          %v1657 = vld [vmem:[#allocation12 + $0x58] sm:$0xf]
          %v1658 = vld [vmem:[#allocation12 + $0x5c] sm:$0xf]
          %v1659 = vld [vmem:[#allocation12 + $0x60] sm:$0xf]
          %v1660 = vld [vmem:[#allocation12 + $0x64] sm:$0xf]
          %v1661 = vld [vmem:[#allocation12 + $0x68] sm:$0xf]
          %v1662 = vld [vmem:[#allocation12 + $0x6c] sm:$0xf]
          %v1663 = vld [vmem:[#allocation12 + $0x70] sm:$0xf]
          %v1664 = vld [vmem:[#allocation12 + $0x74] sm:$0xf]
          %v1665 = vld [vmem:[#allocation12 + $0x78] sm:$0xf]
          %v1666 = vld [vmem:[#allocation12 + $0x7c] sm:$0xf]
          %v1668 = vlaneseq
          %v1669 = vshrl.u32 %v1668, 7
          %v1670 = vsub.s32 0, %v1669
          %v1671 = vrot.slane %v1584, %v1670
          %v1705 = vunpack.c.l.b16 %v1635
          %v1706 = vunpack.c.l.b16 %v1636
          %v1707 = vunpack.c.l.b16 %v1637
          %v1708 = vunpack.c.l.b16 %v1638
          %v1709 = vunpack.c.l.b16 %v1639
          %v1710 = vunpack.c.l.b16 %v1640
          %v1711 = vunpack.c.l.b16 %v1641
          %v1712 = vunpack.c.l.b16 %v1642
          %v1713 = vunpack.c.l.b16 %v1643
          %v1714 = vunpack.c.l.b16 %v1644
          %v1715 = vunpack.c.l.b16 %v1645
          %v1716 = vunpack.c.l.b16 %v1646
          %v1717 = vunpack.c.l.b16 %v1647
          %v1718 = vunpack.c.l.b16 %v1648
          %v1719 = vunpack.c.l.b16 %v1649
          %v1720 = vunpack.c.l.b16 %v1650
          %v1721 = vunpack.c.l.b16 %v1651
          %v1722 = vunpack.c.l.b16 %v1652
          %v1723 = vunpack.c.l.b16 %v1653
          %v1724 = vunpack.c.l.b16 %v1654
          %v1725 = vunpack.c.l.b16 %v1655
          %v1726 = vunpack.c.l.b16 %v1656
          %v1727 = vunpack.c.l.b16 %v1657
          %v1728 = vunpack.c.l.b16 %v1658
          %v1729 = vunpack.c.l.b16 %v1659
          %v1730 = vunpack.c.l.b16 %v1660
          %v1731 = vunpack.c.l.b16 %v1661
          %v1732 = vunpack.c.l.b16 %v1662
          %v1733 = vunpack.c.l.b16 %v1663
          %v1734 = vunpack.c.l.b16 %v1664
          %v1735 = vunpack.c.l.b16 %v1665
          %v1736 = vunpack.c.l.b16 %v1666
          %v1737 = vpack.c.b16 %v1706, %v1705
          %v1738 = vpack.c.b16 %v1708, %v1707
          %v1739 = vpack.c.b16 %v1710, %v1709
          %v1740 = vpack.c.b16 %v1712, %v1711
          %v1741 = vpack.c.b16 %v1714, %v1713
          %v1742 = vpack.c.b16 %v1716, %v1715
          %v1743 = vpack.c.b16 %v1718, %v1717
          %v1744 = vpack.c.b16 %v1720, %v1719
          %v1745 = vpack.c.b16 %v1722, %v1721
          %v1746 = vpack.c.b16 %v1724, %v1723
          %v1747 = vpack.c.b16 %v1726, %v1725
          %v1748 = vpack.c.b16 %v1728, %v1727
          %v1749 = vpack.c.b16 %v1730, %v1729
          %v1750 = vpack.c.b16 %v1732, %v1731
          %v1751 = vpack.c.b16 %v1734, %v1733
          %v1752 = vpack.c.b16 %v1736, %v1735
          %1769 = vmatprep.subr.bf16.mxu0 0
          %1770 = vmatpush1.bf16.msra.mxu0 %v1744
          %1771 = vmatprep.subr.bf16.mxu0 0
          %1772 = vmatpush1.bf16.msra.mxu0 %v1743
          %1773 = vmatprep.subr.bf16.mxu0 0
          %1774 = vmatpush1.bf16.msra.mxu0 %v1742
          %1775 = vmatprep.subr.bf16.mxu0 0
          %1776 = vmatpush1.bf16.msra.mxu0 %v1741
          %1777 = vmatprep.subr.bf16.mxu0 0
          %1778 = vmatpush1.bf16.msra.mxu0 %v1740
          %1779 = vmatprep.subr.bf16.mxu0 0
          %1780 = vmatpush1.bf16.msra.mxu0 %v1739
          %1781 = vmatprep.subr.bf16.mxu0 0
          %1782 = vmatpush1.bf16.msra.mxu0 %v1738
          %1783 = vmatprep.subr.bf16.mxu0 0
          %1784 = vmatpush1.bf16.msra.mxu0 %v1737
          %1785 = vmatprep.subr.bf16.mxu0 0
          %1786 = vmatpush2.bf16.msra.mxu0 %v1752
          %1787 = vmatprep.subr.bf16.mxu0 0
          %1788 = vmatpush2.bf16.msra.mxu0 %v1751
          %1789 = vmatprep.subr.bf16.mxu0 0
          %1790 = vmatpush2.bf16.msra.mxu0 %v1750
          %1791 = vmatprep.subr.bf16.mxu0 0
          %1792 = vmatpush2.bf16.msra.mxu0 %v1749
          %1793 = vmatprep.subr.bf16.mxu0 0
          %1794 = vmatpush2.bf16.msra.mxu0 %v1748
          %1795 = vmatprep.subr.bf16.mxu0 0
          %1796 = vmatpush2.bf16.msra.mxu0 %v1747
          %1797 = vmatprep.subr.bf16.mxu0 0
          %1798 = vmatpush2.bf16.msra.mxu0 %v1746
          %1799 = vmatprep.subr.bf16.mxu0 0
          %1800 = vmatpush2.bf16.msra.mxu0 %v1745
          %1801 = vmatprep.mubr.bf16.mxu0 %v1634
          %1802 = vmatmul.mubr.bf16.gmra.mxu0 %v1633
          %v1803 = vpop.f32.mrf.mxu0
          %v1804 = vadd.f32 %v1671, %v1803
          %v1805 = vpop.f32.mrf.mxu0
          %v1806 = vpop.f32.mrf.mxu0
          %v1807 = vpop.f32.mrf.mxu0
          %1808 = vdwg.mxu0
          %v1809 = vpack.c.bf16 %v1804, %v1804
          %s1810 = smul.addr %s1597, 4
          %s1811 = scalar_lea.vmem [#allocation3], %s1810
          %1812 = vst [vmem:[%s1811] sm:$0xf] %v1809
          %v1813 = vld [vmem:[#allocation5] sm:$0x3]
          %v1814 = vunpack.c.l.bf16 %v1809
          %v1815 = vrot.slane %v1814, 4
          %v1816 = vadd.f32 %v1814, %v1815
          %v1817 = vrot.slane %v1816, 2
          %v1818 = vadd.f32 %v1816, %v1817
          %v1819 = vrot.slane %v1818, 1
          %v1820 = vadd.f32 %v1818, %v1819
          %v1821 = vmul.f32 %v1814, %v1814
          %v1822 = vrot.slane %v1821, 4
          %v1823 = vadd.f32 %v1821, %v1822
          %v1824 = vrot.slane %v1823, 2
          %v1825 = vadd.f32 %v1823, %v1824
          %v1826 = vrot.slane %v1825, 1
          %v1827 = vadd.f32 %v1825, %v1826
          %vm1828 = vcmask 1040384
          %v1829 = vsel %vm1828, %v1820, %v1827
          %v1830 = vadd.f32 %v1813, %v1829
          %1831 = vst [vmem:[#allocation5] sm:$0x3] %v1830
        $region96: #{docking_forward.1} parent=59 // pred_fallthru
          _
        %p1832 = scmp.eq.s32.totalorder %s32, 2
        // Predicated region
        $region97: #{docking_forward.1} parent=59 // pred_check
          %p1833 = pneg %p1832
        $region98: #{docking_forward.1} parent=59 // pred_check_branch
          %1835 = sbr.rel (%p1833) target = $region100
        $region99: #{docking_forward.1} parent=59 // pred_region
          %v1836 = vld [vmem:[#allocation15] sm:$0x1]
          %v1837 = vld [vmem:[#allocation15 + $0x1] sm:$0x1]
          %v1838 = vld [vmem:[#allocation15 + $0x2] sm:$0x1]
          %v1839 = vld [vmem:[#allocation15 + $0x3] sm:$0x1]
          %v1840 = vld [vmem:[#allocation5] sm:$0x1]
          %v1841 = vmul.f32 %v1840, 0.125
          %v1842 = vld [vmem:[#allocation5 + $0x1] sm:$0x1]
          %v1843 = vmul.f32 %v1842, 0.125
          %v1844 = vmul.f32 %v1841, %v1841
          %v1845 = vsub.f32 %v1843, %v1844
          %v1846 = vadd.f32 %v1845, 1e-05
          %v1847 = vrsqrt.pop %v1846
          %v1848 = vmul.f32 %v1836, %v1847
          %v1849 = vmul.f32 %v1841, %v1848
          %v1850 = vsub.f32 %v1837, %v1849
          %s1851 = sshra.s32 %s502, 3
          %s1852 = sand.u32 %s502, 7
          %s1853 = smul.addr %s1851, 4
          %s1854 = scalar_lea.vmem [#allocation3], %s1853
          %v1855 = vld [vmem:[%s1854] sm:$0xf]
          %v1856 = vunpack.c.l.bf16 %v1855
          %v1858 = vlaneseq
          %v1859 = vshrl.u32 %v1858, 7
          %v1860 = vsub.s32 0, %v1859
          %v1861 = vrot.slane %v1848, %v1860
          %v1863 = vmul.f32 %v1856, %v1861
          %v1865 = vlaneseq
          %v1866 = vshrl.u32 %v1865, 7
          %v1867 = vsub.s32 0, %v1866
          %v1868 = vrot.slane %v1850, %v1867
          %v1870 = vadd.f32 %v1863, %v1868
          %v1871 = vmax.f32 %v1870, 0.0
          %v1873 = vlaneseq
          %v1874 = vshrl.u32 %v1873, 7
          %v1875 = vsub.s32 0, %v1874
          %v1876 = vrot.slane %v1838, %v1875
          %v1878 = vpack.c.bf16 %v1876, %v1876
          %v1879 = vpack.c.bf16 %v1871, %v1871
          %1880 = vmatprep.subr.bf16.mxu0 0
          %1881 = vmatpush1.bf16.xpose.msra.mxu0 0
          %1882 = vmatprep.subr.bf16.mxu0 0
          %1883 = vmatpush1.bf16.xpose.msra.mxu0 0
          %1884 = vmatprep.subr.bf16.mxu0 0
          %1885 = vmatpush1.bf16.xpose.msra.mxu0 0
          %1886 = vmatprep.subr.bf16.mxu0 0
          %1887 = vmatpush1.bf16.xpose.msra.mxu0 0
          %1888 = vmatprep.subr.bf16.mxu0 0
          %1889 = vmatpush1.bf16.xpose.msra.mxu0 0
          %1890 = vmatprep.subr.bf16.mxu0 0
          %1891 = vmatpush1.bf16.xpose.msra.mxu0 0
          %1892 = vmatprep.subr.bf16.mxu0 0
          %1893 = vmatpush1.bf16.xpose.msra.mxu0 0
          %1894 = vmatprep.subr.bf16.mxu0 0
          %1895 = vmatpush1.bf16.xpose.msra.mxu0 %v1879
          %1896 = vmatprep.subr.bf16.mxu0 0
          %1897 = vmatpush2.bf16.xpose.msra.mxu0 0
          %1898 = vmatprep.subr.bf16.mxu0 0
          %1899 = vmatpush2.bf16.xpose.msra.mxu0 0
          %1900 = vmatprep.subr.bf16.mxu0 0
          %1901 = vmatpush2.bf16.xpose.msra.mxu0 0
          %1902 = vmatprep.subr.bf16.mxu0 0
          %1903 = vmatpush2.bf16.xpose.msra.mxu0 0
          %1904 = vmatprep.subr.bf16.mxu0 0
          %1905 = vmatpush2.bf16.xpose.msra.mxu0 0
          %1906 = vmatprep.subr.bf16.mxu0 0
          %1907 = vmatpush2.bf16.xpose.msra.mxu0 0
          %1908 = vmatprep.subr.bf16.mxu0 0
          %1909 = vmatpush2.bf16.xpose.msra.mxu0 0
          %1910 = vmatprep.subr.bf16.mxu0 0
          %1911 = vmatpush2.bf16.xpose.msra.mxu0 0
          %1912 = vmatprep.mubr.bf16.mxu0 0
          %1913 = vmatmul.mubr.bf16.gmra.mxu0 %v1878
          %v1914 = vpop.f32.mrf.mxu0
          %v1915 = vadd.f32 0.0, %v1914
          %v1916 = vpop.f32.mrf.mxu0
          %v1917 = vpop.f32.mrf.mxu0
          %v1918 = vpop.f32.mrf.mxu0
          %1919 = vdwg.mxu0
          %1921 = vset.pattern.permute.xlu0 0
          %1922 = vperm.xlu0 %1921, %v1839
          %v1923 = vpop.permute.xlu0 %1922
          %v1925 = vlaneseq
          %v1926 = vshrl.u32 %v1925, 7
          %v1927 = vsub.s32 0, %v1926
          %v1928 = vrot.slane %v1923, %v1927
          %v1929 = vadd.f32 %v1915, %v1928
          %vm1930 = vcmask 57344
          %1931 = vst.msk [vmem:[%s482] sm:$0x1] %vm1930, %v1929
        $region100: #{docking_forward.1} parent=59 // pred_fallthru
          _
        %s1932 = sand.u32 %s280, 1
        %s1933 = scalar_lea.sflag [#allocation8], %s1932
        %s1934 = sand.u32 %s280, 1
        %s1935 = scalar_lea.vmem [#allocation17], %s1934
        // Predicated region
        $region101: #{docking_forward.1} parent=59 // pred_check
          %p1936 = pneg %p290
        $region102: #{docking_forward.1} parent=59 // pred_check_branch
          %1938 = sbr.rel (%p1936) target = $region104
        $region103: #{docking_forward.1} parent=59 // pred_region
          %p1939 = scmp.eq.s32.totalorder %s32, 2
          %s1940 = scalar_select %p1939, %s33, 0
          %s1942 = ssub.s32 16, 16
          %1943 = vsyncadd %s1933, %s1942
          %s1944 = smul.addr %s1940, 16
          %s1945 = scalar_lea.hbm %s10, %s1944
          %s1947 = sshll.u32 %s1935, 4
          %s1948 = int_to_ptr.vmem [resolvable:$true] %s1947
          %1950 = dma.vmem_to_hbm [thread:$0]  %s1948, 16, %s1945, %s1933
        $region104: #{docking_forward.1} parent=59 // pred_fallthru
          _
      $region60: #{docking_forward.1} parent=5 // pred_fallthru
        _
      %p1951 = scmp.le.s32.totalorder 2, %s23
      // Predicated region
      $region105: #{docking_forward.1} parent=5 // pred_check
        %p1952 = pneg %p1951
      $region106: #{docking_forward.1} parent=5 // pred_check_branch
        %1954 = sbr.rel (%p1952) target = $region108
      $region107: #{docking_forward.1} parent=5 // pred_region
        %s1955 = ssub.s32 %s23, 2
        // Predicated region
        $region109: #{docking_forward.1} parent=107 // pred_check
          %p1956 = pneg %p296
        $region110: #{docking_forward.1} parent=107 // pred_check_branch
          %1958 = sbr.rel (%p1956) target = $region112
        $region111: #{docking_forward.1} parent=107 // pred_region
          %s1959 = sand.u32 %s281, 1
          %s1960 = scalar_lea.sflag [#allocation8], %s1959
          %s1961 = sand.u32 %s281, 1
          %s1962 = scalar_lea.vmem [#allocation17], %s1961
          %1963 = dma.done %s1960, 16
        $region112: #{docking_forward.1} parent=107 // pred_fallthru
          _
      $region108: #{docking_forward.1} parent=5 // pred_fallthru
        _
    $region6: #{docking_forward.1} parent=1 // loop_footer
      %s27 = sadd.s32 1, %s23
    $region7: #{docking_forward.1} parent=1 // loop_footer_branch
      %22 = sbr.rel target = $region3
    $region8: #{docking_forward.1} parent=1 // loop_exit
      _
    %1964 = vsyncpa [#allocation7], 1
    %s1965 = scalar_lea.sflag [#allocation7], 1
    %1966 = vsyncpa %s1965, 1
    %1967 = vsyncpa [#allocation10], 1
    %1968 = vsyncpa [#allocation13], 1
    %1969 = vsyncpa [#allocation16], 1
    %1970 = vsyncpa [#allocation8], 1
    %s1971 = scalar_lea.sflag [#allocation8], 1
    %1972 = vsyncpa %s1971, 1

</llo_original>
